<compile_context>
chip_gen: v6e
topology: v6e:2x2x1
jax: 0.10.0
libtpu: 0.0.40
codegen_flags: <defaults>
</compile_context>

<pallas_src>
import functools

import jax
import jax.numpy as jnp
from jax import lax
from jax.experimental import pallas as pl
from jax.experimental.pallas import tpu as pltpu


def _round_up(x, m):
    return ((x + m - 1) // m) * m


def _self_attention_kernel(v_ref, k_ref, q_ref,
                           wv_ref, wk_ref, wq_ref, wfct_ref, bias_ref,
                           o_ref, *, heads, head_dim):
    """One batch element per grid step; all heads fused in the body.

    v_ref/k_ref : (Lk, E)    raw-layout inputs (no wrapper transpose)
    q_ref       : (Lq, E)
    wv/wk/wq    : (E, E)     block-diagonal per-head weights, already W.T
                             (softmax scale folded into wq)
    wfct_ref    : (E, E_pad) fc_out.weight.T, zero-padded to lane-dense width
    bias_ref    : (1, E_pad) fc_out bias, zero-padded
    o_ref       : (Lq, E_pad)
    """
    # Shared per-head projections as single K=E MXU matmuls (block-diagonal
    # weights make this exactly the per-head Linear of the module).
    v = jnp.dot(v_ref[...], wv_ref[...], preferred_element_type=jnp.float32)
    k = jnp.dot(k_ref[...], wk_ref[...], preferred_element_type=jnp.float32)
    q = jnp.dot(q_ref[...], wq_ref[...], preferred_element_type=jnp.float32)

    # Per-head attention; heads is small & static, so this unrolls.
    head_outs = []
    for h in range(heads):
        s = slice(h * head_dim, (h + 1) * head_dim)
        qh, kh, vh = q[:, s], k[:, s], v[:, s]
        # q @ k^T without an explicit transpose: contract last dims directly.
        scores = lax.dot_general(
            qh, kh, dimension_numbers=(((1,), (1,)), ((), ())),
            preferred_element_type=jnp.float32)
        m = jnp.max(scores, axis=-1, keepdims=True)
        p = jnp.exp(scores - m)
        l = jnp.sum(p, axis=-1, keepdims=True)
        attn = p * pl.reciprocal(l, approx=True)   # EUP slot, not a VALU divide
        head_outs.append(jnp.dot(attn, vh, preferred_element_type=jnp.float32))

    concat = jnp.concatenate(head_outs, axis=-1)       # (Lq, E)

    # Fused fc_out: one K=E matmul into a lane-dense (multiple-of-128) block.
    out = jnp.dot(concat, wfct_ref[...], preferred_element_type=jnp.float32)
    o_ref[...] = (out + bias_ref[...]).astype(o_ref.dtype)


def self_attention(values, keys, queries, wv, wk, wq, wfc, bfc, *, heads):
    """Pallas implementation of SelfAttention.forward.

    values, keys: (N, Lk, E)   queries: (N, Lq, E)
    wv, wk, wq:   (hd, hd) torch Linear weights (y = x @ W.T, no bias)
    wfc:          (E, E)   fc_out.weight     bfc: (E,) fc_out.bias
    returns:      (N, Lq, E)
    """
    N, Lq, E = queries.shape
    Lk = keys.shape[1]
    hd = E // heads
    assert hd * heads == E

    dtype = queries.dtype
    E_pad = _round_up(E, 128)   # lane-dense output width

    # Fold shared per-head (hd,hd) projections into block-diagonal (E,E)
    # weights (x reshaped per-head @ W.T  ==  x_flat @ blockdiag(W.T)).
    eye_h = jnp.eye(heads, dtype=wv.dtype)
    wv_big = jnp.kron(eye_h, wv.T)
    wk_big = jnp.kron(eye_h, wk.T)
    # Fold the module's 1/sqrt(embed_size) attention scale into Wq.
    scale = 1.0 / (float(E) ** 0.5)
    wq_big = jnp.kron(eye_h, wq.T) * scale

    # fc_out weight transposed in the wrapper; pad to a multiple of 128 lanes.
    wfct = wfc.T
    bias = bfc.reshape(1, E)
    if E_pad != E:
        wfct = jnp.pad(wfct, ((0, 0), (0, E_pad - E)))
        bias = jnp.pad(bias, ((0, 0), (0, E_pad - E)))

    kernel = functools.partial(_self_attention_kernel, heads=heads, head_dim=hd)

    sq = pl.Squeezed()
    grid_spec = pltpu.PrefetchScalarGridSpec(
        num_scalar_prefetch=0,
        grid=(N,),
        in_specs=[
            pl.BlockSpec((sq, Lk, E), lambda n: (n, 0, 0)),   # values (raw layout)
            pl.BlockSpec((sq, Lk, E), lambda n: (n, 0, 0)),   # keys
            pl.BlockSpec((sq, Lq, E), lambda n: (n, 0, 0)),   # queries
            pl.BlockSpec((E, E), lambda n: (0, 0)),           # Wv block-diag (W.T)
            pl.BlockSpec((E, E), lambda n: (0, 0)),           # Wk block-diag (W.T)
            pl.BlockSpec((E, E), lambda n: (0, 0)),           # Wq block-diag (scaled)
            pl.BlockSpec((E, E_pad), lambda n: (0, 0)),       # fc_out.weight.T (padded)
            pl.BlockSpec((1, E_pad), lambda n: (0, 0)),       # fc_out.bias (padded)
        ],
        out_specs=pl.BlockSpec((sq, Lq, E_pad), lambda n: (n, 0, 0)),
    )

    out = pl.pallas_call(
        kernel,
        out_shape=jax.ShapeDtypeStruct((N, Lq, E_pad), dtype),
        grid_spec=grid_spec,
        compiler_params=pltpu.CompilerParams(
            dimension_semantics=("parallel",)),   # batch axis shards over TCs
    )(values, keys, queries, wv_big, wk_big, wq_big, wfct, bias)

    return out[..., :E] if E_pad != E else out


def self_attention_ref(values, keys, queries, wv, wk, wq, wfc, bfc, *, heads):
    """Pure-JAX reference mirroring the PyTorch forward exactly."""
    N, Lq, E = queries.shape
    Lk = keys.shape[1]
    hd = E // heads
    v = values.reshape(N, Lk, heads, hd) @ wv.T
    k = keys.reshape(N, Lk, heads, hd) @ wk.T
    q = queries.reshape(N, Lq, heads, hd) @ wq.T
    att = jnp.einsum('nqhd,nkhd->nhqk', q, k) / (E ** 0.5)
    att = jax.nn.softmax(att, axis=3)
    out = jnp.einsum('nhql,nlhd->nqhd', att, v).reshape(N, Lq, heads * hd)
    return out @ wfc.T + bfc


if __name__ == "__main__":
    # Small shapes consistent with the module: embed_size=32, heads=4 -> head_dim=8
    N, L, E, HEADS = 2, 8, 32, 4
    HD = E // HEADS

    key = jax.random.PRNGKey(0)
    ks = jax.random.split(key, 8)
    values = jax.random.normal(ks[0], (N, L, E), jnp.float32)
    keys_in = jax.random.normal(ks[1], (N, L, E), jnp.float32)
    queries = jax.random.normal(ks[2], (N, L, E), jnp.float32)

    # Deterministic parameter init (torch nn.Linear shapes: weight (out, in))
    wv = jax.random.normal(ks[3], (HD, HD), jnp.float32) * 0.1
    wk = jax.random.normal(ks[4], (HD, HD), jnp.float32) * 0.1
    wq = jax.random.normal(ks[5], (HD, HD), jnp.float32) * 0.1
    wfc = jax.random.normal(ks[6], (E, E), jnp.float32) * 0.1
    bfc = jax.random.normal(ks[7], (E,), jnp.float32) * 0.1

    out = self_attention(values, keys_in, queries, wv, wk, wq, wfc, bfc,
                         heads=HEADS)
    out = jax.block_until_ready(out)

    ref = self_attention_ref(values, keys_in, queries, wv, wk, wq, wfc, bfc,
                             heads=HEADS)
    assert out.shape == (N, L, E)
    # Tolerance covers the EUP approximate reciprocal used in the softmax
    # normalization (everything else accumulates in f32).
    assert jnp.allclose(out, ref, atol=5e-3, rtol=5e-3), "mismatch vs reference"

    print("KERNEL_OK")
</pallas_src>

<mosaic_0001>
module attributes {stable_mosaic.version = 11 : i64} {
  func.func @_self_attention_kernel(%arg0: i32, %arg1: memref<1x8x32xf32, #tpu.memory_space<vmem>>, %arg2: memref<1x8x32xf32, #tpu.memory_space<vmem>>, %arg3: memref<1x8x32xf32, #tpu.memory_space<vmem>>, %arg4: memref<32x32xf32, #tpu.memory_space<vmem>>, %arg5: memref<32x32xf32, #tpu.memory_space<vmem>>, %arg6: memref<32x32xf32, #tpu.memory_space<vmem>>, %arg7: memref<32x128xf32, #tpu.memory_space<vmem>>, %arg8: memref<1x128xf32, #tpu.memory_space<vmem>>, %arg9: memref<1x8x128xf32, #tpu.memory_space<vmem>>) attributes {dimension_semantics = [#tpu.dimension_semantics<parallel>], iteration_bounds = array<i64: 2>, scalar_prefetch = 0 : i64, scratch_operands = 0 : i64, tpu.core_type = #tpu.core_type<tc>, window_params = [{transform_indices = @transform_0, window_bounds = array<i64: 1, 8, 32>}, {transform_indices = @transform_1, window_bounds = array<i64: 1, 8, 32>}, {transform_indices = @transform_2, window_bounds = array<i64: 1, 8, 32>}, {pipeline_mode = #tpu.pipeline_mode<synchronous>, transform_indices = @transform_3, window_bounds = array<i64: 32, 32>}, {pipeline_mode = #tpu.pipeline_mode<synchronous>, transform_indices = @transform_4, window_bounds = array<i64: 32, 32>}, {pipeline_mode = #tpu.pipeline_mode<synchronous>, transform_indices = @transform_5, window_bounds = array<i64: 32, 32>}, {pipeline_mode = #tpu.pipeline_mode<synchronous>, transform_indices = @transform_6, window_bounds = array<i64: 32, 128>}, {pipeline_mode = #tpu.pipeline_mode<synchronous>, transform_indices = @transform_7, window_bounds = array<i64: 1, 128>}, {transform_indices = @transform_8, window_bounds = array<i64: 1, 8, 128>}]} {
    %c0 = arith.constant 0 : index
    %c0_0 = arith.constant 0 : index
    %c0_1 = arith.constant 0 : index
    %0 = vector.load %arg1[%c0, %c0_0, %c0_1] : memref<1x8x32xf32, #tpu.memory_space<vmem>>, vector<1x8x32xf32>
    %1 = vector.shape_cast %0 : vector<1x8x32xf32> to vector<8x32xf32>
    %c0_2 = arith.constant 0 : index
    %c0_3 = arith.constant 0 : index
    %2 = vector.load %arg4[%c0_2, %c0_3] : memref<32x32xf32, #tpu.memory_space<vmem>>, vector<32x32xf32>
    %cst = arith.constant dense<0.000000e+00> : vector<8x32xf32>
    %3 = tpu.matmul %1, %2, %cst {dimension_numbers = #tpu.dot_dimension_numbers<[1], [0], [0], [1], [0, 0, 1, 1], [], []>} : vector<8x32xf32>, vector<32x32xf32>, vector<8x32xf32> -> vector<8x32xf32>
    %c0_4 = arith.constant 0 : index
    %c0_5 = arith.constant 0 : index
    %c0_6 = arith.constant 0 : index
    %4 = vector.load %arg2[%c0_4, %c0_5, %c0_6] : memref<1x8x32xf32, #tpu.memory_space<vmem>>, vector<1x8x32xf32>
    %5 = vector.shape_cast %4 : vector<1x8x32xf32> to vector<8x32xf32>
    %c0_7 = arith.constant 0 : index
    %c0_8 = arith.constant 0 : index
    %6 = vector.load %arg5[%c0_7, %c0_8] : memref<32x32xf32, #tpu.memory_space<vmem>>, vector<32x32xf32>
    %cst_9 = arith.constant dense<0.000000e+00> : vector<8x32xf32>
    %7 = tpu.matmul %5, %6, %cst_9 {dimension_numbers = #tpu.dot_dimension_numbers<[1], [0], [0], [1], [0, 0, 1, 1], [], []>} : vector<8x32xf32>, vector<32x32xf32>, vector<8x32xf32> -> vector<8x32xf32>
    %c0_10 = arith.constant 0 : index
    %c0_11 = arith.constant 0 : index
    %c0_12 = arith.constant 0 : index
    %8 = vector.load %arg3[%c0_10, %c0_11, %c0_12] : memref<1x8x32xf32, #tpu.memory_space<vmem>>, vector<1x8x32xf32>
    %9 = vector.shape_cast %8 : vector<1x8x32xf32> to vector<8x32xf32>
    %c0_13 = arith.constant 0 : index
    %c0_14 = arith.constant 0 : index
    %10 = vector.load %arg6[%c0_13, %c0_14] : memref<32x32xf32, #tpu.memory_space<vmem>>, vector<32x32xf32>
    %cst_15 = arith.constant dense<0.000000e+00> : vector<8x32xf32>
    %11 = tpu.matmul %9, %10, %cst_15 {dimension_numbers = #tpu.dot_dimension_numbers<[1], [0], [0], [1], [0, 0, 1, 1], [], []>} : vector<8x32xf32>, vector<32x32xf32>, vector<8x32xf32> -> vector<8x32xf32>
    %12 = vector.extract_strided_slice %11 {offsets = [0, 0], sizes = [8, 8], strides = [1, 1]} : vector<8x32xf32> to vector<8x8xf32>
    %13 = vector.extract_strided_slice %7 {offsets = [0, 0], sizes = [8, 8], strides = [1, 1]} : vector<8x32xf32> to vector<8x8xf32>
    %14 = vector.extract_strided_slice %3 {offsets = [0, 0], sizes = [8, 8], strides = [1, 1]} : vector<8x32xf32> to vector<8x8xf32>
    %cst_16 = arith.constant dense<0.000000e+00> : vector<8x8xf32>
    %15 = tpu.matmul %12, %13, %cst_16 {dimension_numbers = #tpu.dot_dimension_numbers<[1], [1], [0], [0], [0, 0, 1, 0], [], []>} : vector<8x8xf32>, vector<8x8xf32>, vector<8x8xf32> -> vector<8x8xf32>
    %cst_17 = arith.constant dense<0xFF800000> : vector<8xf32>
    %16 = vector.multi_reduction <maximumf>, %15, %cst_17 [1] : vector<8x8xf32> to vector<8xf32>
    %17 = vector.shape_cast %16 : vector<8xf32> to vector<8x1xf32>
    %18 = vector.broadcast %17 : vector<8x1xf32> to vector<8x8xf32>
    %19 = arith.subf %15, %18 : vector<8x8xf32>
    %20 = math.exp %19 : vector<8x8xf32>
    %cst_18 = arith.constant dense<0.000000e+00> : vector<8xf32>
    %21 = vector.multi_reduction <add>, %20, %cst_18 [1] : vector<8x8xf32> to vector<8xf32>
    %22 = vector.shape_cast %21 : vector<8xf32> to vector<8x1xf32>
    %23 = tpu.reciprocal %22 {approx = true} : vector<8x1xf32> -> vector<8x1xf32>
    %24 = vector.broadcast %23 : vector<8x1xf32> to vector<8x8xf32>
    %25 = arith.mulf %20, %24 : vector<8x8xf32>
    %cst_19 = arith.constant dense<0.000000e+00> : vector<8x8xf32>
    %26 = tpu.matmul %25, %14, %cst_19 {dimension_numbers = #tpu.dot_dimension_numbers<[1], [0], [0], [1], [0, 0, 1, 1], [], []>} : vector<8x8xf32>, vector<8x8xf32>, vector<8x8xf32> -> vector<8x8xf32>
    %27 = vector.extract_strided_slice %11 {offsets = [0, 8], sizes = [8, 8], strides = [1, 1]} : vector<8x32xf32> to vector<8x8xf32>
    %28 = vector.extract_strided_slice %7 {offsets = [0, 8], sizes = [8, 8], strides = [1, 1]} : vector<8x32xf32> to vector<8x8xf32>
    %29 = vector.extract_strided_slice %3 {offsets = [0, 8], sizes = [8, 8], strides = [1, 1]} : vector<8x32xf32> to vector<8x8xf32>
    %cst_20 = arith.constant dense<0.000000e+00> : vector<8x8xf32>
    %30 = tpu.matmul %27, %28, %cst_20 {dimension_numbers = #tpu.dot_dimension_numbers<[1], [1], [0], [0], [0, 0, 1, 0], [], []>} : vector<8x8xf32>, vector<8x8xf32>, vector<8x8xf32> -> vector<8x8xf32>
    %cst_21 = arith.constant dense<0xFF800000> : vector<8xf32>
    %31 = vector.multi_reduction <maximumf>, %30, %cst_21 [1] : vector<8x8xf32> to vector<8xf32>
    %32 = vector.shape_cast %31 : vector<8xf32> to vector<8x1xf32>
    %33 = vector.broadcast %32 : vector<8x1xf32> to vector<8x8xf32>
    %34 = arith.subf %30, %33 : vector<8x8xf32>
    %35 = math.exp %34 : vector<8x8xf32>
    %cst_22 = arith.constant dense<0.000000e+00> : vector<8xf32>
    %36 = vector.multi_reduction <add>, %35, %cst_22 [1] : vector<8x8xf32> to vector<8xf32>
    %37 = vector.shape_cast %36 : vector<8xf32> to vector<8x1xf32>
    %38 = tpu.reciprocal %37 {approx = true} : vector<8x1xf32> -> vector<8x1xf32>
    %39 = vector.broadcast %38 : vector<8x1xf32> to vector<8x8xf32>
    %40 = arith.mulf %35, %39 : vector<8x8xf32>
    %cst_23 = arith.constant dense<0.000000e+00> : vector<8x8xf32>
    %41 = tpu.matmul %40, %29, %cst_23 {dimension_numbers = #tpu.dot_dimension_numbers<[1], [0], [0], [1], [0, 0, 1, 1], [], []>} : vector<8x8xf32>, vector<8x8xf32>, vector<8x8xf32> -> vector<8x8xf32>
    %42 = vector.extract_strided_slice %11 {offsets = [0, 16], sizes = [8, 8], strides = [1, 1]} : vector<8x32xf32> to vector<8x8xf32>
    %43 = vector.extract_strided_slice %7 {offsets = [0, 16], sizes = [8, 8], strides = [1, 1]} : vector<8x32xf32> to vector<8x8xf32>
    %44 = vector.extract_strided_slice %3 {offsets = [0, 16], sizes = [8, 8], strides = [1, 1]} : vector<8x32xf32> to vector<8x8xf32>
    %cst_24 = arith.constant dense<0.000000e+00> : vector<8x8xf32>
    %45 = tpu.matmul %42, %43, %cst_24 {dimension_numbers = #tpu.dot_dimension_numbers<[1], [1], [0], [0], [0, 0, 1, 0], [], []>} : vector<8x8xf32>, vector<8x8xf32>, vector<8x8xf32> -> vector<8x8xf32>
    %cst_25 = arith.constant dense<0xFF800000> : vector<8xf32>
    %46 = vector.multi_reduction <maximumf>, %45, %cst_25 [1] : vector<8x8xf32> to vector<8xf32>
    %47 = vector.shape_cast %46 : vector<8xf32> to vector<8x1xf32>
    %48 = vector.broadcast %47 : vector<8x1xf32> to vector<8x8xf32>
    %49 = arith.subf %45, %48 : vector<8x8xf32>
    %50 = math.exp %49 : vector<8x8xf32>
    %cst_26 = arith.constant dense<0.000000e+00> : vector<8xf32>
    %51 = vector.multi_reduction <add>, %50, %cst_26 [1] : vector<8x8xf32> to vector<8xf32>
    %52 = vector.shape_cast %51 : vector<8xf32> to vector<8x1xf32>
    %53 = tpu.reciprocal %52 {approx = true} : vector<8x1xf32> -> vector<8x1xf32>
    %54 = vector.broadcast %53 : vector<8x1xf32> to vector<8x8xf32>
    %55 = arith.mulf %50, %54 : vector<8x8xf32>
    %cst_27 = arith.constant dense<0.000000e+00> : vector<8x8xf32>
    %56 = tpu.matmul %55, %44, %cst_27 {dimension_numbers = #tpu.dot_dimension_numbers<[1], [0], [0], [1], [0, 0, 1, 1], [], []>} : vector<8x8xf32>, vector<8x8xf32>, vector<8x8xf32> -> vector<8x8xf32>
    %57 = vector.extract_strided_slice %11 {offsets = [0, 24], sizes = [8, 8], strides = [1, 1]} : vector<8x32xf32> to vector<8x8xf32>
    %58 = vector.extract_strided_slice %7 {offsets = [0, 24], sizes = [8, 8], strides = [1, 1]} : vector<8x32xf32> to vector<8x8xf32>
    %59 = vector.extract_strided_slice %3 {offsets = [0, 24], sizes = [8, 8], strides = [1, 1]} : vector<8x32xf32> to vector<8x8xf32>
    %cst_28 = arith.constant dense<0.000000e+00> : vector<8x8xf32>
    %60 = tpu.matmul %57, %58, %cst_28 {dimension_numbers = #tpu.dot_dimension_numbers<[1], [1], [0], [0], [0, 0, 1, 0], [], []>} : vector<8x8xf32>, vector<8x8xf32>, vector<8x8xf32> -> vector<8x8xf32>
    %cst_29 = arith.constant dense<0xFF800000> : vector<8xf32>
    %61 = vector.multi_reduction <maximumf>, %60, %cst_29 [1] : vector<8x8xf32> to vector<8xf32>
    %62 = vector.shape_cast %61 : vector<8xf32> to vector<8x1xf32>
    %63 = vector.broadcast %62 : vector<8x1xf32> to vector<8x8xf32>
    %64 = arith.subf %60, %63 : vector<8x8xf32>
    %65 = math.exp %64 : vector<8x8xf32>
    %cst_30 = arith.constant dense<0.000000e+00> : vector<8xf32>
    %66 = vector.multi_reduction <add>, %65, %cst_30 [1] : vector<8x8xf32> to vector<8xf32>
    %67 = vector.shape_cast %66 : vector<8xf32> to vector<8x1xf32>
    %68 = tpu.reciprocal %67 {approx = true} : vector<8x1xf32> -> vector<8x1xf32>
    %69 = vector.broadcast %68 : vector<8x1xf32> to vector<8x8xf32>
    %70 = arith.mulf %65, %69 : vector<8x8xf32>
    %cst_31 = arith.constant dense<0.000000e+00> : vector<8x8xf32>
    %71 = tpu.matmul %70, %59, %cst_31 {dimension_numbers = #tpu.dot_dimension_numbers<[1], [0], [0], [1], [0, 0, 1, 1], [], []>} : vector<8x8xf32>, vector<8x8xf32>, vector<8x8xf32> -> vector<8x8xf32>
    %72 = tpu.concatenate %26, %41, %56, %71 in 1 : vector<8x8xf32>, vector<8x8xf32>, vector<8x8xf32>, vector<8x8xf32> -> vector<8x32xf32>
    %c0_32 = arith.constant 0 : index
    %c0_33 = arith.constant 0 : index
    %73 = vector.load %arg7[%c0_32, %c0_33] : memref<32x128xf32, #tpu.memory_space<vmem>>, vector<32x128xf32>
    %cst_34 = arith.constant dense<0.000000e+00> : vector<8x128xf32>
    %74 = tpu.matmul %72, %73, %cst_34 {dimension_numbers = #tpu.dot_dimension_numbers<[1], [0], [0], [1], [0, 0, 1, 1], [], []>} : vector<8x32xf32>, vector<32x128xf32>, vector<8x128xf32> -> vector<8x128xf32>
    %c0_35 = arith.constant 0 : index
    %c0_36 = arith.constant 0 : index
    %75 = vector.load %arg8[%c0_35, %c0_36] : memref<1x128xf32, #tpu.memory_space<vmem>>, vector<1x128xf32>
    %76 = vector.broadcast %75 : vector<1x128xf32> to vector<8x128xf32>
    %77 = arith.addf %74, %76 : vector<8x128xf32>
    %c0_37 = arith.constant 0 : index
    %c0_38 = arith.constant 0 : index
    %c0_39 = arith.constant 0 : index
    %78 = vector.load %arg9[%c0_37, %c0_38, %c0_39] : memref<1x8x128xf32, #tpu.memory_space<vmem>>, vector<1x8x128xf32>
    %79 = vector.shape_cast %78 : vector<1x8x128xf32> to vector<8x128xf32>
    %80 = vector.shape_cast %77 : vector<8x128xf32> to vector<1x8x128xf32>
    tpu.vector_store %arg9[%c0_37, %c0_38, %c0_39], %80 {strides = array<i32>} : memref<1x8x128xf32, #tpu.memory_space<vmem>>, vector<1x8x128xf32>,
    return
  }
  func.func @transform_0(%arg0: i32) -> (i32, i32, i32) {
    %c0_i32 = arith.constant 0 : i32
    %c0_i32_0 = arith.constant 0 : i32
    %c0_i32_1 = arith.constant 0 : i32
    return %arg0, %c0_i32, %c0_i32_0 : i32, i32, i32
  }
  func.func @transform_1(%arg0: i32) -> (i32, i32, i32) {
    %c0_i32 = arith.constant 0 : i32
    %c0_i32_0 = arith.constant 0 : i32
    %c0_i32_1 = arith.constant 0 : i32
    return %arg0, %c0_i32, %c0_i32_0 : i32, i32, i32
  }
  func.func @transform_2(%arg0: i32) -> (i32, i32, i32) {
    %c0_i32 = arith.constant 0 : i32
    %c0_i32_0 = arith.constant 0 : i32
    %c0_i32_1 = arith.constant 0 : i32
    return %arg0, %c0_i32, %c0_i32_0 : i32, i32, i32
  }
  func.func @transform_3(%arg0: i32) -> (i32, i32) {
    %c0_i32 = arith.constant 0 : i32
    %c0_i32_0 = arith.constant 0 : i32
    %c0_i32_1 = arith.constant 0 : i32
    return %c0_i32, %c0_i32_0 : i32, i32
  }
  func.func @transform_4(%arg0: i32) -> (i32, i32) {
    %c0_i32 = arith.constant 0 : i32
    %c0_i32_0 = arith.constant 0 : i32
    %c0_i32_1 = arith.constant 0 : i32
    return %c0_i32, %c0_i32_0 : i32, i32
  }
  func.func @transform_5(%arg0: i32) -> (i32, i32) {
    %c0_i32 = arith.constant 0 : i32
    %c0_i32_0 = arith.constant 0 : i32
    %c0_i32_1 = arith.constant 0 : i32
    return %c0_i32, %c0_i32_0 : i32, i32
  }
  func.func @transform_6(%arg0: i32) -> (i32, i32) {
    %c0_i32 = arith.constant 0 : i32
    %c0_i32_0 = arith.constant 0 : i32
    %c0_i32_1 = arith.constant 0 : i32
    return %c0_i32, %c0_i32_0 : i32, i32
  }
  func.func @transform_7(%arg0: i32) -> (i32, i32) {
    %c0_i32 = arith.constant 0 : i32
    %c0_i32_0 = arith.constant 0 : i32
    %c0_i32_1 = arith.constant 0 : i32
    return %c0_i32, %c0_i32_0 : i32, i32
  }
  func.func @transform_8(%arg0: i32) -> (i32, i32, i32) {
    %c0_i32 = arith.constant 0 : i32
    %c0_i32_0 = arith.constant 0 : i32
    %c0_i32_1 = arith.constant 0 : i32
    return %arg0, %c0_i32, %c0_i32_0 : i32, i32, i32
  }
}

</mosaic_0001>

<llo_original>
// kernel: tpu_custom_call.1
$region0: #{tpu_custom_call.1}
  #allocation0 [shape = 'u32[]', space=smem, size = 0x4, offset = 0x4, fixed_abs, tag = 'smem constant byte address 0x4 - core index']
  #allocation1 [shape = 'u32[144,128]{1,0:T(1,128)}', space=vmem, size = 0x12000, scoped, tag = 'internal scratch']
  %s0 = inlined_call_operand.hbm [shape: f32[2,8,32], index: 0, kind: input, shape index: {}]
  %s1 = inlined_call_operand.hbm [shape: f32[2,8,32], index: 1, kind: input, shape index: {}]
  %s2 = inlined_call_operand.hbm [shape: f32[2,8,32], index: 2, kind: input, shape index: {}]
  %s3 = inlined_call_operand.hbm [shape: f32[32,32], index: 3, kind: input, shape index: {}]
  %s4 = inlined_call_operand.hbm [shape: f32[32,32], index: 4, kind: input, shape index: {}]
  %s5 = inlined_call_operand.hbm [shape: f32[32,32], index: 5, kind: input, shape index: {}]
  %s6 = inlined_call_operand.hbm [shape: f32[32,128], index: 6, kind: input, shape index: {}]
  %s7 = inlined_call_operand.vmem [shape: f32[1,128], index: 7, kind: input, shape index: {}]
  %s8 = inlined_call_operand.hbm [shape: f32[2,8,128], index: 8, kind: output, shape index: {}]
  %s9 = sld [smem:[#allocation0]]
  $region93: #{tpu_custom_call.1} parent=0
    _
  %s11 = ssub.s32 1, %s9
  %s12 = scalar_select 0, %s11, %s9
  $region1: #{tpu_custom_call.1} parent=0
    #allocation2 [shape = 'u8[8192]{0}', space=vmem, size = 0x2000, scoped, tag = 'input window, operand 0']
    #allocation3 [shape = 's32[2]{0}', space=sflag, size = 0x8, scoped, tag = 'scoped memory for tpu_custom_call.1']
    #allocation4 [shape = 's32[2]{0}', space=sflag, size = 0x8, scoped, tag = 'scoped memory for tpu_custom_call.1']
    #allocation5 [shape = 'u8[8192]{0}', space=vmem, size = 0x2000, scoped, tag = 'input window, operand 1']
    #allocation6 [shape = 's32[2]{0}', space=sflag, size = 0x8, scoped, tag = 'scoped memory for tpu_custom_call.1']
    #allocation7 [shape = 'u8[8192]{0}', space=vmem, size = 0x2000, scoped, tag = 'input window, operand 2']
    #allocation8 [shape = 'u8[16384]{0}', space=vmem, size = 0x4000, scoped, tag = 'input window, operand 3, single buffered']
    #allocation9 [shape = 's32[1]{0}', space=sflag, size = 0x4, scoped, tag = 'scoped memory for tpu_custom_call.1']
    #allocation10 [shape = 'u8[16384]{0}', space=vmem, size = 0x4000, scoped, tag = 'input window, operand 4, single buffered']
    #allocation11 [shape = 'u8[16384]{0}', space=vmem, size = 0x4000, scoped, tag = 'input window, operand 5, single buffered']
    #allocation12 [shape = 's32[1]{0}', space=sflag, size = 0x4, scoped, tag = 'scoped memory for tpu_custom_call.1']
    #allocation13 [shape = 'u8[16384]{0}', space=vmem, size = 0x4000, scoped, tag = 'input window, operand 6, single buffered']
    #allocation14 [shape = 'u8[8192]{0}', space=vmem, size = 0x2000, scoped, tag = 'output window, operand 0']
    %13 = vsyncpa [#allocation3], 0
    %s14 = scalar_lea.sflag [#allocation3], 1
    %15 = vsyncpa %s14, 0
    %16 = vsyncpa [#allocation6], 0
    %s17 = scalar_lea.sflag [#allocation6], 1
    %18 = vsyncpa %s17, 0
    %19 = vsyncpa [#allocation9], 0
    %20 = vsyncpa [#allocation12], 0
    %21 = vsyncpa [#allocation4], 0
    %s22 = scalar_lea.sflag [#allocation4], 1
    %23 = vsyncpa %s22, 0
    loop: start=0, step=1, limit=4
    $region2: #{tpu_custom_call.1} parent=1 // loop_pre_header
      _
    $region3: #{tpu_custom_call.1} parent=1 // loop_header
      %s25 = sphi 0, %s29
      %p26 = scmp.ge.s32.totalorder %s25, 4
      %s35 = sphi 0, %s37
      %s38 = sphi 0, %s35
      %s39 = sphi 0, %s38
      %s55 = sphi 0, %s39
      %s61 = sphi 0, %s63
      %s64 = sphi 0, %s61
      %s65 = sphi 0, %s64
      %s81 = sphi 0, %s65
      %s87 = sphi 0, %s89
      %s90 = sphi 0, %s87
      %s91 = sphi 0, %s90
      %s107 = sphi 0, %s91
      %s111 = sphi 0, %s111
      %s113 = sphi 0, %s111
      %s114 = sphi 0, %s113
      %s128 = sphi 0, %s114
      %s132 = sphi 0, %s132
      %s134 = sphi 0, %s132
      %s135 = sphi 0, %s134
      %s149 = sphi 0, %s135
      %s153 = sphi 0, %s153
      %s155 = sphi 0, %s153
      %s156 = sphi 0, %s155
      %s170 = sphi 0, %s156
      %s174 = sphi 0, %s174
      %s176 = sphi 0, %s174
      %s177 = sphi 0, %s176
      %s191 = sphi 0, %s177
      %s195 = sphi 0, %s195
      %s197 = sphi 0, %s195
      %s198 = sphi 0, %s197
      %s212 = sphi 0, %s198
      %s218 = sphi 0, %s220
      %s221 = sphi 0, %s218
      %s222 = sphi 0, %s221
      %s238 = sphi 0, %s222
    $region4: #{tpu_custom_call.1} parent=1 // loop_header_branch
      %28 = sbr.rel (%p26) target = $region8
    $region5: #{tpu_custom_call.1} parent=1 // loop_body
      %s30 = ssub.s32 %s25, 1
      %s31 = ssub.s32 %s25, 2
      %s32 = sadd.s32 %s25, 1
      %s33 = ssub.s32 %s25, %s32
      %p34 = scmp.eq.s32.totalorder %s33, 0
      %s36 = sadd.s32 %s35, 1
      %s37 = scalar_select %p34, %s35, %s36
      %p40 = pneg %p34
      %p41 = scmp.eq.s32.totalorder %s25, 1
      %p42 = por %p40, %p41
      %p43 = scmp.ne.s32.totalorder %s35, %s38
      %p44 = scmp.eq.s32.totalorder %s25, 0
      %p45 = por %p43, %p44
      %p46 = scmp.ne.s32.totalorder %s35, %s38
      %p47 = scmp.eq.s32.totalorder %s30, 1
      %p48 = por %p46, %p47
      %p49 = scmp.ne.s32.totalorder %s38, %s39
      %p50 = scmp.eq.s32.totalorder %s30, 0
      %p51 = por %p49, %p50
      %p52 = scmp.ne.s32.totalorder %s38, %s39
      %p53 = scmp.eq.s32.totalorder %s31, 1
      %p54 = por %p52, %p53
      %p56 = scmp.ne.s32.totalorder %s39, %s55
      %p57 = scmp.eq.s32.totalorder %s31, 0
      %p58 = por %p56, %p57
      %s59 = ssub.s32 %s25, %s32
      %p60 = scmp.eq.s32.totalorder %s59, 0
      %s62 = sadd.s32 %s61, 1
      %s63 = scalar_select %p60, %s61, %s62
      %p66 = pneg %p60
      %p67 = scmp.eq.s32.totalorder %s25, 1
      %p68 = por %p66, %p67
      %p69 = scmp.ne.s32.totalorder %s61, %s64
      %p70 = scmp.eq.s32.totalorder %s25, 0
      %p71 = por %p69, %p70
      %p72 = scmp.ne.s32.totalorder %s61, %s64
      %p73 = scmp.eq.s32.totalorder %s30, 1
      %p74 = por %p72, %p73
      %p75 = scmp.ne.s32.totalorder %s64, %s65
      %p76 = scmp.eq.s32.totalorder %s30, 0
      %p77 = por %p75, %p76
      %p78 = scmp.ne.s32.totalorder %s64, %s65
      %p79 = scmp.eq.s32.totalorder %s31, 1
      %p80 = por %p78, %p79
      %p82 = scmp.ne.s32.totalorder %s65, %s81
      %p83 = scmp.eq.s32.totalorder %s31, 0
      %p84 = por %p82, %p83
      %s85 = ssub.s32 %s25, %s32
      %p86 = scmp.eq.s32.totalorder %s85, 0
      %s88 = sadd.s32 %s87, 1
      %s89 = scalar_select %p86, %s87, %s88
      %p92 = pneg %p86
      %p93 = scmp.eq.s32.totalorder %s25, 1
      %p94 = por %p92, %p93
      %p95 = scmp.ne.s32.totalorder %s87, %s90
      %p96 = scmp.eq.s32.totalorder %s25, 0
      %p97 = por %p95, %p96
      %p98 = scmp.ne.s32.totalorder %s87, %s90
      %p99 = scmp.eq.s32.totalorder %s30, 1
      %p100 = por %p98, %p99
      %p101 = scmp.ne.s32.totalorder %s90, %s91
      %p102 = scmp.eq.s32.totalorder %s30, 0
      %p103 = por %p101, %p102
      %p104 = scmp.ne.s32.totalorder %s90, %s91
      %p105 = scmp.eq.s32.totalorder %s31, 1
      %p106 = por %p104, %p105
      %p108 = scmp.ne.s32.totalorder %s91, %s107
      %p109 = scmp.eq.s32.totalorder %s31, 0
      %p110 = por %p108, %p109
      %s112 = sadd.s32 %s111, 1
      %p115 = scmp.eq.s32.totalorder %s25, 1
      %p116 = scmp.ne.s32.totalorder %s111, %s113
      %p117 = scmp.eq.s32.totalorder %s25, 0
      %p118 = por %p116, %p117
      %p119 = scmp.ne.s32.totalorder %s111, %s113
      %p120 = scmp.eq.s32.totalorder %s30, 1
      %p121 = por %p119, %p120
      %p122 = scmp.ne.s32.totalorder %s113, %s114
      %p123 = scmp.eq.s32.totalorder %s30, 0
      %p124 = por %p122, %p123
      %p125 = scmp.ne.s32.totalorder %s113, %s114
      %p126 = scmp.eq.s32.totalorder %s31, 1
      %p127 = por %p125, %p126
      %p129 = scmp.ne.s32.totalorder %s114, %s128
      %p130 = scmp.eq.s32.totalorder %s31, 0
      %p131 = por %p129, %p130
      %s133 = sadd.s32 %s132, 1
      %p136 = scmp.eq.s32.totalorder %s25, 1
      %p137 = scmp.ne.s32.totalorder %s132, %s134
      %p138 = scmp.eq.s32.totalorder %s25, 0
      %p139 = por %p137, %p138
      %p140 = scmp.ne.s32.totalorder %s132, %s134
      %p141 = scmp.eq.s32.totalorder %s30, 1
      %p142 = por %p140, %p141
      %p143 = scmp.ne.s32.totalorder %s134, %s135
      %p144 = scmp.eq.s32.totalorder %s30, 0
      %p145 = por %p143, %p144
      %p146 = scmp.ne.s32.totalorder %s134, %s135
      %p147 = scmp.eq.s32.totalorder %s31, 1
      %p148 = por %p146, %p147
      %p150 = scmp.ne.s32.totalorder %s135, %s149
      %p151 = scmp.eq.s32.totalorder %s31, 0
      %p152 = por %p150, %p151
      %s154 = sadd.s32 %s153, 1
      %p157 = scmp.eq.s32.totalorder %s25, 1
      %p158 = scmp.ne.s32.totalorder %s153, %s155
      %p159 = scmp.eq.s32.totalorder %s25, 0
      %p160 = por %p158, %p159
      %p161 = scmp.ne.s32.totalorder %s153, %s155
      %p162 = scmp.eq.s32.totalorder %s30, 1
      %p163 = por %p161, %p162
      %p164 = scmp.ne.s32.totalorder %s155, %s156
      %p165 = scmp.eq.s32.totalorder %s30, 0
      %p166 = por %p164, %p165
      %p167 = scmp.ne.s32.totalorder %s155, %s156
      %p168 = scmp.eq.s32.totalorder %s31, 1
      %p169 = por %p167, %p168
      %p171 = scmp.ne.s32.totalorder %s156, %s170
      %p172 = scmp.eq.s32.totalorder %s31, 0
      %p173 = por %p171, %p172
      %s175 = sadd.s32 %s174, 1
      %p178 = scmp.eq.s32.totalorder %s25, 1
      %p179 = scmp.ne.s32.totalorder %s174, %s176
      %p180 = scmp.eq.s32.totalorder %s25, 0
      %p181 = por %p179, %p180
      %p182 = scmp.ne.s32.totalorder %s174, %s176
      %p183 = scmp.eq.s32.totalorder %s30, 1
      %p184 = por %p182, %p183
      %p185 = scmp.ne.s32.totalorder %s176, %s177
      %p186 = scmp.eq.s32.totalorder %s30, 0
      %p187 = por %p185, %p186
      %p188 = scmp.ne.s32.totalorder %s176, %s177
      %p189 = scmp.eq.s32.totalorder %s31, 1
      %p190 = por %p188, %p189
      %p192 = scmp.ne.s32.totalorder %s177, %s191
      %p193 = scmp.eq.s32.totalorder %s31, 0
      %p194 = por %p192, %p193
      %s196 = sadd.s32 %s195, 1
      %p199 = scmp.eq.s32.totalorder %s25, 1
      %p200 = scmp.ne.s32.totalorder %s195, %s197
      %p201 = scmp.eq.s32.totalorder %s25, 0
      %p202 = por %p200, %p201
      %p203 = scmp.ne.s32.totalorder %s195, %s197
      %p204 = scmp.eq.s32.totalorder %s30, 1
      %p205 = por %p203, %p204
      %p206 = scmp.ne.s32.totalorder %s197, %s198
      %p207 = scmp.eq.s32.totalorder %s30, 0
      %p208 = por %p206, %p207
      %p209 = scmp.ne.s32.totalorder %s197, %s198
      %p210 = scmp.eq.s32.totalorder %s31, 1
      %p211 = por %p209, %p210
      %p213 = scmp.ne.s32.totalorder %s198, %s212
      %p214 = scmp.eq.s32.totalorder %s31, 0
      %p215 = por %p213, %p214
      %s216 = ssub.s32 %s25, %s32
      %p217 = scmp.eq.s32.totalorder %s216, 0
      %s219 = sadd.s32 %s218, 1
      %s220 = scalar_select %p217, %s218, %s219
      %p223 = pneg %p217
      %p224 = scmp.eq.s32.totalorder %s25, 1
      %p225 = por %p223, %p224
      %p226 = scmp.ne.s32.totalorder %s218, %s221
      %p227 = scmp.eq.s32.totalorder %s25, 0
      %p228 = por %p226, %p227
      %p229 = scmp.ne.s32.totalorder %s218, %s221
      %p230 = scmp.eq.s32.totalorder %s30, 1
      %p231 = por %p229, %p230
      %p232 = scmp.ne.s32.totalorder %s221, %s222
      %p233 = scmp.eq.s32.totalorder %s30, 0
      %p234 = por %p232, %p233
      %p235 = scmp.ne.s32.totalorder %s221, %s222
      %p236 = scmp.eq.s32.totalorder %s31, 1
      %p237 = por %p235, %p236
      %p239 = scmp.ne.s32.totalorder %s222, %s238
      %p240 = scmp.eq.s32.totalorder %s31, 0
      %p241 = por %p239, %p240
      %p242 = scmp.le.s32.totalorder 1, %s25
      %p243 = scmp.lt.s32.totalorder %s25, 3
      %p244 = pnand %p242, %p243
      %p245 = pneg %p244
      // Predicated region
      $region9: #{tpu_custom_call.1} parent=5 // pred_check
        _
      $region10: #{tpu_custom_call.1} parent=5 // pred_check_branch
        %247 = sbr.rel (%p244) target = $region12
      $region11: #{tpu_custom_call.1} parent=5 // pred_region
        %s248 = ssub.s32 %s25, 1
        // Predicated region
        $region13: #{tpu_custom_call.1} parent=11 // pred_check
          %p249 = pneg %p124
        $region14: #{tpu_custom_call.1} parent=11 // pred_check_branch
          %251 = sbr.rel (%p249) target = $region16
        $region15: #{tpu_custom_call.1} parent=11 // pred_region
          %s253 = ssub.s32 512, 512
          %254 = vsyncadd [#allocation9], %s253
          %s255 = sshll.u32 [#allocation8], 4
          %s256 = int_to_ptr.vmem [resolvable:$true] %s255
          %261 = dma.hbm_to_vmem [thread:$0]  %s3, 512, %s256, [#allocation9], 128, 128, 8
        $region16: #{tpu_custom_call.1} parent=11 // pred_fallthru
          _
        // Predicated region
        $region17: #{tpu_custom_call.1} parent=11 // pred_check
          %p262 = pneg %p145
        $region18: #{tpu_custom_call.1} parent=11 // pred_check_branch
          %264 = sbr.rel (%p262) target = $region20
        $region19: #{tpu_custom_call.1} parent=11 // pred_region
          %s266 = ssub.s32 512, 512
          %267 = vsyncadd [#allocation9], %s266
          %s268 = sshll.u32 [#allocation10], 4
          %s269 = int_to_ptr.vmem [resolvable:$true] %s268
          %274 = dma.hbm_to_vmem [thread:$0]  %s4, 512, %s269, [#allocation9], 128, 128, 8
        $region20: #{tpu_custom_call.1} parent=11 // pred_fallthru
          _
        // Predicated region
        $region21: #{tpu_custom_call.1} parent=11 // pred_check
          %p275 = pneg %p166
        $region22: #{tpu_custom_call.1} parent=11 // pred_check_branch
          %277 = sbr.rel (%p275) target = $region24
        $region23: #{tpu_custom_call.1} parent=11 // pred_region
          %s279 = ssub.s32 512, 512
          %280 = vsyncadd [#allocation12], %s279
          %s281 = sshll.u32 [#allocation11], 4
          %s282 = int_to_ptr.vmem [resolvable:$true] %s281
          %287 = dma.hbm_to_vmem [thread:$0]  %s5, 512, %s282, [#allocation12], 128, 128, 8
        $region24: #{tpu_custom_call.1} parent=11 // pred_fallthru
          _
        // Predicated region
        $region25: #{tpu_custom_call.1} parent=11 // pred_check
          %p288 = pneg %p187
        $region26: #{tpu_custom_call.1} parent=11 // pred_check_branch
          %290 = sbr.rel (%p288) target = $region28
        $region27: #{tpu_custom_call.1} parent=11 // pred_region
          %s292 = ssub.s32 512, 512
          %293 = vsyncadd [#allocation12], %s292
          %s294 = sshll.u32 [#allocation13], 4
          %s295 = int_to_ptr.vmem [resolvable:$true] %s294
          %300 = dma.hbm_to_vmem [thread:$0]  %s6, 512, %s295, [#allocation12], 128, 128, 8
        $region28: #{tpu_custom_call.1} parent=11 // pred_fallthru
          _
        // Predicated region
        $region29: #{tpu_custom_call.1} parent=11 // pred_check
          %p301 = pneg %p208
        $region30: #{tpu_custom_call.1} parent=11 // pred_check_branch
          %303 = sbr.rel (%p301) target = $region32
        $region31: #{tpu_custom_call.1} parent=11 // pred_region
          _
        $region32: #{tpu_custom_call.1} parent=11 // pred_fallthru
          _
      $region12: #{tpu_custom_call.1} parent=5 // pred_fallthru
        _
      %p304 = scmp.lt.s32.totalorder %s25, 2
      // Predicated region
      $region33: #{tpu_custom_call.1} parent=5 // pred_check
        %p305 = pneg %p304
      $region34: #{tpu_custom_call.1} parent=5 // pred_check_branch
        %307 = sbr.rel (%p305) target = $region36
      $region35: #{tpu_custom_call.1} parent=5 // pred_region
        // Predicated region
        $region37: #{tpu_custom_call.1} parent=35 // pred_check
          %p308 = pneg %p45
        $region38: #{tpu_custom_call.1} parent=35 // pred_check_branch
          %310 = sbr.rel (%p308) target = $region40
        $region39: #{tpu_custom_call.1} parent=35 // pred_region
          %s311 = sand.u32 %s35, 1
          %s312 = scalar_lea.sflag [#allocation3], %s311
          %s313 = sand.u32 %s35, 1
          %s314 = smul.addr %s313, 8
          %s315 = scalar_lea.vmem [#allocation2], %s314
          %s317 = ssub.s32 128, 128
          %318 = vsyncadd %s312, %s317
          %s319 = smul.addr %s25, 128
          %s320 = scalar_lea.hbm %s0, %s319
          %s322 = sshll.u32 %s315, 4
          %s323 = int_to_ptr.vmem [resolvable:$true] %s322
          %325 = dma.hbm_to_vmem [thread:$0]  %s320, 128, %s323, %s312
        $region40: #{tpu_custom_call.1} parent=35 // pred_fallthru
          _
        // Predicated region
        $region41: #{tpu_custom_call.1} parent=35 // pred_check
          %p326 = pneg %p71
        $region42: #{tpu_custom_call.1} parent=35 // pred_check_branch
          %328 = sbr.rel (%p326) target = $region44
        $region43: #{tpu_custom_call.1} parent=35 // pred_region
          %s329 = sand.u32 %s25, 1
          %s330 = scalar_lea.sflag [#allocation6], %s329
          %s331 = sand.u32 %s61, 1
          %s332 = smul.addr %s331, 8
          %s333 = scalar_lea.vmem [#allocation5], %s332
          %s335 = ssub.s32 128, 128
          %336 = vsyncadd %s330, %s335
          %s337 = smul.addr %s25, 128
          %s338 = scalar_lea.hbm %s1, %s337
          %s340 = sshll.u32 %s333, 4
          %s341 = int_to_ptr.vmem [resolvable:$true] %s340
          %343 = dma.hbm_to_vmem [thread:$0]  %s338, 128, %s341, %s330
        $region44: #{tpu_custom_call.1} parent=35 // pred_fallthru
          _
        // Predicated region
        $region45: #{tpu_custom_call.1} parent=35 // pred_check
          %p344 = pneg %p97
        $region46: #{tpu_custom_call.1} parent=35 // pred_check_branch
          %346 = sbr.rel (%p344) target = $region48
        $region47: #{tpu_custom_call.1} parent=35 // pred_region
          %s347 = sand.u32 %s25, 1
          %s348 = scalar_lea.sflag [#allocation6], %s347
          %s349 = sand.u32 %s87, 1
          %s350 = smul.addr %s349, 8
          %s351 = scalar_lea.vmem [#allocation7], %s350
          %s353 = ssub.s32 128, 128
          %354 = vsyncadd %s348, %s353
          %s355 = smul.addr %s25, 128
          %s356 = scalar_lea.hbm %s2, %s355
          %s358 = sshll.u32 %s351, 4
          %s359 = int_to_ptr.vmem [resolvable:$true] %s358
          %361 = dma.hbm_to_vmem [thread:$0]  %s356, 128, %s359, %s348
        $region48: #{tpu_custom_call.1} parent=35 // pred_fallthru
          _
      $region36: #{tpu_custom_call.1} parent=5 // pred_fallthru
        _
      %p362 = scmp.le.s32.totalorder 1, %s25
      %p363 = scmp.lt.s32.totalorder %s25, 3
      %p364 = pnand %p362, %p363
      %p365 = pneg %p364
      // Predicated region
      $region49: #{tpu_custom_call.1} parent=5 // pred_check
        _
      $region50: #{tpu_custom_call.1} parent=5 // pred_check_branch
        %367 = sbr.rel (%p364) target = $region52
      $region51: #{tpu_custom_call.1} parent=5 // pred_region
        %s368 = ssub.s32 %s25, 1
        %s369 = sand.u32 %s38, 1
        %s370 = scalar_lea.sflag [#allocation3], %s369
        %s371 = sand.u32 %s38, 1
        %s372 = smul.addr %s371, 8
        %s373 = scalar_lea.vmem [#allocation2], %s372
        // Predicated region
        $region53: #{tpu_custom_call.1} parent=51 // pred_check
          %p374 = pneg %p51
        $region54: #{tpu_custom_call.1} parent=51 // pred_check_branch
          %376 = sbr.rel (%p374) target = $region56
        $region55: #{tpu_custom_call.1} parent=51 // pred_region
          %377 = dma.done %s370, 128
        $region56: #{tpu_custom_call.1} parent=51 // pred_fallthru
          _
        %s378 = sand.u32 %s30, 1
        %s379 = scalar_lea.sflag [#allocation6], %s378
        %s380 = sand.u32 %s64, 1
        %s381 = smul.addr %s380, 8
        %s382 = scalar_lea.vmem [#allocation5], %s381
        // Predicated region
        $region57: #{tpu_custom_call.1} parent=51 // pred_check
          %p383 = pneg %p77
        $region58: #{tpu_custom_call.1} parent=51 // pred_check_branch
          %385 = sbr.rel (%p383) target = $region60
        $region59: #{tpu_custom_call.1} parent=51 // pred_region
          %386 = dma.done %s379, 128
        $region60: #{tpu_custom_call.1} parent=51 // pred_fallthru
          _
        %s387 = sand.u32 %s30, 1
        %s388 = scalar_lea.sflag [#allocation6], %s387
        %s389 = sand.u32 %s90, 1
        %s390 = smul.addr %s389, 8
        %s391 = scalar_lea.vmem [#allocation7], %s390
        // Predicated region
        $region61: #{tpu_custom_call.1} parent=51 // pred_check
          %p392 = pneg %p103
        $region62: #{tpu_custom_call.1} parent=51 // pred_check_branch
          %394 = sbr.rel (%p392) target = $region64
        $region63: #{tpu_custom_call.1} parent=51 // pred_region
          %395 = dma.done %s388, 128
        $region64: #{tpu_custom_call.1} parent=51 // pred_fallthru
          _
        // Predicated region
        $region65: #{tpu_custom_call.1} parent=51 // pred_check
          %p396 = pneg %p124
        $region66: #{tpu_custom_call.1} parent=51 // pred_check_branch
          %398 = sbr.rel (%p396) target = $region68
        $region67: #{tpu_custom_call.1} parent=51 // pred_region
          %399 = dma.done [#allocation9], 512
        $region68: #{tpu_custom_call.1} parent=51 // pred_fallthru
          _
        // Predicated region
        $region69: #{tpu_custom_call.1} parent=51 // pred_check
          %p400 = pneg %p145
        $region70: #{tpu_custom_call.1} parent=51 // pred_check_branch
          %402 = sbr.rel (%p400) target = $region72
        $region71: #{tpu_custom_call.1} parent=51 // pred_region
          %403 = dma.done [#allocation9], 512
        $region72: #{tpu_custom_call.1} parent=51 // pred_fallthru
          _
        // Predicated region
        $region73: #{tpu_custom_call.1} parent=51 // pred_check
          %p404 = pneg %p166
        $region74: #{tpu_custom_call.1} parent=51 // pred_check_branch
          %406 = sbr.rel (%p404) target = $region76
        $region75: #{tpu_custom_call.1} parent=51 // pred_region
          %407 = dma.done [#allocation12], 512
        $region76: #{tpu_custom_call.1} parent=51 // pred_fallthru
          _
        // Predicated region
        $region77: #{tpu_custom_call.1} parent=51 // pred_check
          %p408 = pneg %p187
        $region78: #{tpu_custom_call.1} parent=51 // pred_check_branch
          %410 = sbr.rel (%p408) target = $region80
        $region79: #{tpu_custom_call.1} parent=51 // pred_region
          %411 = dma.done [#allocation12], 512
        $region80: #{tpu_custom_call.1} parent=51 // pred_fallthru
          _
        %s412 = sand.u32 %s38, 1
        %s413 = scalar_lea.sflag [#allocation3], %s412
        %s414 = sand.u32 %s38, 1
        %s415 = smul.addr %s414, 8
        %s416 = scalar_lea.vmem [#allocation2], %s415
        %p417 = pneg %p51
        %p418 = pneg %p48
        %s419 = sand.u32 %s30, 1
        %s420 = scalar_lea.sflag [#allocation6], %s419
        %s421 = sand.u32 %s64, 1
        %s422 = smul.addr %s421, 8
        %s423 = scalar_lea.vmem [#allocation5], %s422
        %p424 = pneg %p77
        %p425 = pneg %p74
        %s426 = sand.u32 %s30, 1
        %s427 = scalar_lea.sflag [#allocation6], %s426
        %s428 = sand.u32 %s90, 1
        %s429 = smul.addr %s428, 8
        %s430 = scalar_lea.vmem [#allocation7], %s429
        %p431 = pneg %p103
        %p432 = pneg %p100
        %p433 = pneg %p124
        %p434 = pneg %p121
        %p435 = pneg %p145
        %p436 = pneg %p142
        %p437 = pneg %p166
        %p438 = pneg %p163
        %p439 = pneg %p187
        %p440 = pneg %p184
        %p441 = pneg %p208
        %p442 = pneg %p205
        %p443 = pneg %p234
        %p444 = pneg %p231
        %s445 = sand.u32 %s221, 1
        %s446 = scalar_lea.sflag [#allocation4], %s445
        %s447 = sand.u32 %s221, 1
        %s448 = smul.addr %s447, 8
        %s449 = scalar_lea.vmem [#allocation14], %s448
        %v450 = vld [vmem:[%s373] sm:$0xff]
        %v451 = vld [vmem:[#allocation8] sm:$0xff]
        %v452 = vld [vmem:[#allocation8 + $0x8] sm:$0xff]
        %v453 = vld [vmem:[#allocation8 + $0x10] sm:$0xff]
        %v454 = vld [vmem:[#allocation8 + $0x18] sm:$0xff]
        %vm455 = vcmask 261120
        %v457 = vsel %vm455, %v450, 0
        %459 = vmatprep.subr.mxu0 0.0
        %460 = vmatpush1.msra.mxu0 0.0
        %461 = vmatprep.subr.mxu0 0.0
        %462 = vmatpush1.msra.mxu0 0.0
        %463 = vmatprep.subr.mxu0 0.0
        %464 = vmatpush1.msra.mxu0 0.0
        %465 = vmatprep.subr.mxu0 0.0
        %466 = vmatpush1.msra.mxu0 0.0
        %467 = vmatprep.subr.mxu0 0.0
        %468 = vmatpush1.msra.mxu0 0.0
        %469 = vmatprep.subr.mxu0 0.0
        %470 = vmatpush1.msra.mxu0 0.0
        %471 = vmatprep.subr.mxu0 0.0
        %472 = vmatpush1.msra.mxu0 0.0
        %473 = vmatprep.subr.mxu0 0.0
        %474 = vmatpush1.msra.mxu0 0.0
        %475 = vmatprep.subr.mxu0 0.0
        %476 = vmatpush1.msra.mxu0 0.0
        %477 = vmatprep.subr.mxu0 0.0
        %478 = vmatpush1.msra.mxu0 0.0
        %479 = vmatprep.subr.mxu0 0.0
        %480 = vmatpush1.msra.mxu0 0.0
        %481 = vmatprep.subr.mxu0 0.0
        %482 = vmatpush1.msra.mxu0 0.0
        %483 = vmatprep.subr.mxu0 0.0
        %484 = vmatpush1.msra.mxu0 %v454
        %485 = vmatprep.subr.mxu0 0.0
        %486 = vmatpush1.msra.mxu0 %v453
        %487 = vmatprep.subr.mxu0 0.0
        %488 = vmatpush1.msra.mxu0 %v452
        %489 = vmatprep.subr.mxu0 0.0
        %490 = vmatpush1.msra.mxu0 %v451
        %491 = vmatprep.subr.mxu0 0.0
        %492 = vmatpush2.msra.mxu0 0.0
        %493 = vmatprep.subr.mxu0 0.0
        %494 = vmatpush2.msra.mxu0 0.0
        %495 = vmatprep.subr.mxu0 0.0
        %496 = vmatpush2.msra.mxu0 0.0
        %497 = vmatprep.subr.mxu0 0.0
        %498 = vmatpush2.msra.mxu0 0.0
        %499 = vmatprep.subr.mxu0 0.0
        %500 = vmatpush2.msra.mxu0 0.0
        %501 = vmatprep.subr.mxu0 0.0
        %502 = vmatpush2.msra.mxu0 0.0
        %503 = vmatprep.subr.mxu0 0.0
        %504 = vmatpush2.msra.mxu0 0.0
        %505 = vmatprep.subr.mxu0 0.0
        %506 = vmatpush2.msra.mxu0 0.0
        %507 = vmatprep.subr.mxu0 0.0
        %508 = vmatpush2.msra.mxu0 0.0
        %509 = vmatprep.subr.mxu0 0.0
        %510 = vmatpush2.msra.mxu0 0.0
        %511 = vmatprep.subr.mxu0 0.0
        %512 = vmatpush2.msra.mxu0 0.0
        %513 = vmatprep.subr.mxu0 0.0
        %514 = vmatpush2.msra.mxu0 0.0
        %515 = vmatprep.subr.mxu0 0.0
        %516 = vmatpush2.msra.mxu0 0.0
        %517 = vmatprep.subr.mxu0 0.0
        %518 = vmatpush2.msra.mxu0 0.0
        %519 = vmatprep.subr.mxu0 0.0
        %520 = vmatpush2.msra.mxu0 0.0
        %521 = vmatprep.subr.mxu0 0.0
        %522 = vmatpush2.msra.mxu0 0.0
        %523 = vmatprep.mubr.f32.mxu0 0.0
        %524 = vmatmul.mubr.f32.gmra.mxu0 %v457
        %v525 = vpop.f32.mrf.mxu0
        %v526 = vadd.f32 0.0, %v525
        %v527 = vpop.f32.mrf.mxu0
        %528 = vdwg.mxu0
        %v529 = vld [vmem:[%s382] sm:$0xff]
        %v530 = vld [vmem:[#allocation10] sm:$0xff]
        %v531 = vld [vmem:[#allocation10 + $0x8] sm:$0xff]
        %v532 = vld [vmem:[#allocation10 + $0x10] sm:$0xff]
        %v533 = vld [vmem:[#allocation10 + $0x18] sm:$0xff]
        %v535 = vsel %vm455, %v529, 0
        %537 = vmatprep.subr.mxu0 0.0
        %538 = vmatpush1.msra.mxu0 0.0
        %539 = vmatprep.subr.mxu0 0.0
        %540 = vmatpush1.msra.mxu0 0.0
        %541 = vmatprep.subr.mxu0 0.0
        %542 = vmatpush1.msra.mxu0 0.0
        %543 = vmatprep.subr.mxu0 0.0
        %544 = vmatpush1.msra.mxu0 0.0
        %545 = vmatprep.subr.mxu0 0.0
        %546 = vmatpush1.msra.mxu0 0.0
        %547 = vmatprep.subr.mxu0 0.0
        %548 = vmatpush1.msra.mxu0 0.0
        %549 = vmatprep.subr.mxu0 0.0
        %550 = vmatpush1.msra.mxu0 0.0
        %551 = vmatprep.subr.mxu0 0.0
        %552 = vmatpush1.msra.mxu0 0.0
        %553 = vmatprep.subr.mxu0 0.0
        %554 = vmatpush1.msra.mxu0 0.0
        %555 = vmatprep.subr.mxu0 0.0
        %556 = vmatpush1.msra.mxu0 0.0
        %557 = vmatprep.subr.mxu0 0.0
        %558 = vmatpush1.msra.mxu0 0.0
        %559 = vmatprep.subr.mxu0 0.0
        %560 = vmatpush1.msra.mxu0 0.0
        %561 = vmatprep.subr.mxu0 0.0
        %562 = vmatpush1.msra.mxu0 %v533
        %563 = vmatprep.subr.mxu0 0.0
        %564 = vmatpush1.msra.mxu0 %v532
        %565 = vmatprep.subr.mxu0 0.0
        %566 = vmatpush1.msra.mxu0 %v531
        %567 = vmatprep.subr.mxu0 0.0
        %568 = vmatpush1.msra.mxu0 %v530
        %569 = vmatprep.subr.mxu0 0.0
        %570 = vmatpush2.msra.mxu0 0.0
        %571 = vmatprep.subr.mxu0 0.0
        %572 = vmatpush2.msra.mxu0 0.0
        %573 = vmatprep.subr.mxu0 0.0
        %574 = vmatpush2.msra.mxu0 0.0
        %575 = vmatprep.subr.mxu0 0.0
        %576 = vmatpush2.msra.mxu0 0.0
        %577 = vmatprep.subr.mxu0 0.0
        %578 = vmatpush2.msra.mxu0 0.0
        %579 = vmatprep.subr.mxu0 0.0
        %580 = vmatpush2.msra.mxu0 0.0
        %581 = vmatprep.subr.mxu0 0.0
        %582 = vmatpush2.msra.mxu0 0.0
        %583 = vmatprep.subr.mxu0 0.0
        %584 = vmatpush2.msra.mxu0 0.0
        %585 = vmatprep.subr.mxu0 0.0
        %586 = vmatpush2.msra.mxu0 0.0
        %587 = vmatprep.subr.mxu0 0.0
        %588 = vmatpush2.msra.mxu0 0.0
        %589 = vmatprep.subr.mxu0 0.0
        %590 = vmatpush2.msra.mxu0 0.0
        %591 = vmatprep.subr.mxu0 0.0
        %592 = vmatpush2.msra.mxu0 0.0
        %593 = vmatprep.subr.mxu0 0.0
        %594 = vmatpush2.msra.mxu0 0.0
        %595 = vmatprep.subr.mxu0 0.0
        %596 = vmatpush2.msra.mxu0 0.0
        %597 = vmatprep.subr.mxu0 0.0
        %598 = vmatpush2.msra.mxu0 0.0
        %599 = vmatprep.subr.mxu0 0.0
        %600 = vmatpush2.msra.mxu0 0.0
        %601 = vmatprep.mubr.f32.mxu0 0.0
        %602 = vmatmul.mubr.f32.gmra.mxu0 %v535
        %v603 = vpop.f32.mrf.mxu0
        %v604 = vadd.f32 0.0, %v603
        %v605 = vpop.f32.mrf.mxu0
        %606 = vdwg.mxu0
        %v607 = vld [vmem:[%s391] sm:$0xff]
        %v608 = vld [vmem:[#allocation11] sm:$0xff]
        %v609 = vld [vmem:[#allocation11 + $0x8] sm:$0xff]
        %v610 = vld [vmem:[#allocation11 + $0x10] sm:$0xff]
        %v611 = vld [vmem:[#allocation11 + $0x18] sm:$0xff]
        %v613 = vsel %vm455, %v607, 0
        %615 = vmatprep.subr.mxu0 0.0
        %616 = vmatpush1.msra.mxu0 0.0
        %617 = vmatprep.subr.mxu0 0.0
        %618 = vmatpush1.msra.mxu0 0.0
        %619 = vmatprep.subr.mxu0 0.0
        %620 = vmatpush1.msra.mxu0 0.0
        %621 = vmatprep.subr.mxu0 0.0
        %622 = vmatpush1.msra.mxu0 0.0
        %623 = vmatprep.subr.mxu0 0.0
        %624 = vmatpush1.msra.mxu0 0.0
        %625 = vmatprep.subr.mxu0 0.0
        %626 = vmatpush1.msra.mxu0 0.0
        %627 = vmatprep.subr.mxu0 0.0
        %628 = vmatpush1.msra.mxu0 0.0
        %629 = vmatprep.subr.mxu0 0.0
        %630 = vmatpush1.msra.mxu0 0.0
        %631 = vmatprep.subr.mxu0 0.0
        %632 = vmatpush1.msra.mxu0 0.0
        %633 = vmatprep.subr.mxu0 0.0
        %634 = vmatpush1.msra.mxu0 0.0
        %635 = vmatprep.subr.mxu0 0.0
        %636 = vmatpush1.msra.mxu0 0.0
        %637 = vmatprep.subr.mxu0 0.0
        %638 = vmatpush1.msra.mxu0 0.0
        %639 = vmatprep.subr.mxu0 0.0
        %640 = vmatpush1.msra.mxu0 %v611
        %641 = vmatprep.subr.mxu0 0.0
        %642 = vmatpush1.msra.mxu0 %v610
        %643 = vmatprep.subr.mxu0 0.0
        %644 = vmatpush1.msra.mxu0 %v609
        %645 = vmatprep.subr.mxu0 0.0
        %646 = vmatpush1.msra.mxu0 %v608
        %647 = vmatprep.subr.mxu0 0.0
        %648 = vmatpush2.msra.mxu0 0.0
        %649 = vmatprep.subr.mxu0 0.0
        %650 = vmatpush2.msra.mxu0 0.0
        %651 = vmatprep.subr.mxu0 0.0
        %652 = vmatpush2.msra.mxu0 0.0
        %653 = vmatprep.subr.mxu0 0.0
        %654 = vmatpush2.msra.mxu0 0.0
        %655 = vmatprep.subr.mxu0 0.0
        %656 = vmatpush2.msra.mxu0 0.0
        %657 = vmatprep.subr.mxu0 0.0
        %658 = vmatpush2.msra.mxu0 0.0
        %659 = vmatprep.subr.mxu0 0.0
        %660 = vmatpush2.msra.mxu0 0.0
        %661 = vmatprep.subr.mxu0 0.0
        %662 = vmatpush2.msra.mxu0 0.0
        %663 = vmatprep.subr.mxu0 0.0
        %664 = vmatpush2.msra.mxu0 0.0
        %665 = vmatprep.subr.mxu0 0.0
        %666 = vmatpush2.msra.mxu0 0.0
        %667 = vmatprep.subr.mxu0 0.0
        %668 = vmatpush2.msra.mxu0 0.0
        %669 = vmatprep.subr.mxu0 0.0
        %670 = vmatpush2.msra.mxu0 0.0
        %671 = vmatprep.subr.mxu0 0.0
        %672 = vmatpush2.msra.mxu0 0.0
        %673 = vmatprep.subr.mxu0 0.0
        %674 = vmatpush2.msra.mxu0 0.0
        %675 = vmatprep.subr.mxu0 0.0
        %676 = vmatpush2.msra.mxu0 0.0
        %677 = vmatprep.subr.mxu0 0.0
        %678 = vmatpush2.msra.mxu0 0.0
        %679 = vmatprep.mubr.f32.mxu0 0.0
        %680 = vmatmul.mubr.f32.gmra.mxu0 %v613
        %v681 = vpop.f32.mrf.mxu0
        %v682 = vadd.f32 0.0, %v681
        %v683 = vpop.f32.mrf.mxu0
        %684 = vdwg.mxu0
        %vm685 = vcmask 64512
        %v687 = vsel %vm685, %v682, 0
        %v690 = vsel %vm685, %v604, 0
        %692 = vmatprep.subr.mxu0 0.0
        %693 = vmatpush1.xpose.msra.mxu0 0.0
        %694 = vmatprep.subr.mxu0 0.0
        %695 = vmatpush1.xpose.msra.mxu0 0.0
        %696 = vmatprep.subr.mxu0 0.0
        %697 = vmatpush1.xpose.msra.mxu0 0.0
        %698 = vmatprep.subr.mxu0 0.0
        %699 = vmatpush1.xpose.msra.mxu0 0.0
        %700 = vmatprep.subr.mxu0 0.0
        %701 = vmatpush1.xpose.msra.mxu0 0.0
        %702 = vmatprep.subr.mxu0 0.0
        %703 = vmatpush1.xpose.msra.mxu0 0.0
        %704 = vmatprep.subr.mxu0 0.0
        %705 = vmatpush1.xpose.msra.mxu0 0.0
        %706 = vmatprep.subr.mxu0 0.0
        %707 = vmatpush1.xpose.msra.mxu0 0.0
        %708 = vmatprep.subr.mxu0 0.0
        %709 = vmatpush1.xpose.msra.mxu0 0.0
        %710 = vmatprep.subr.mxu0 0.0
        %711 = vmatpush1.xpose.msra.mxu0 0.0
        %712 = vmatprep.subr.mxu0 0.0
        %713 = vmatpush1.xpose.msra.mxu0 0.0
        %714 = vmatprep.subr.mxu0 0.0
        %715 = vmatpush1.xpose.msra.mxu0 0.0
        %716 = vmatprep.subr.mxu0 0.0
        %717 = vmatpush1.xpose.msra.mxu0 0.0
        %718 = vmatprep.subr.mxu0 0.0
        %719 = vmatpush1.xpose.msra.mxu0 0.0
        %720 = vmatprep.subr.mxu0 0.0
        %721 = vmatpush1.xpose.msra.mxu0 0.0
        %722 = vmatprep.subr.mxu0 0.0
        %723 = vmatpush1.xpose.msra.mxu0 %v690
        %724 = vmatprep.subr.mxu0 0.0
        %725 = vmatpush2.xpose.msra.mxu0 0.0
        %726 = vmatprep.subr.mxu0 0.0
        %727 = vmatpush2.xpose.msra.mxu0 0.0
        %728 = vmatprep.subr.mxu0 0.0
        %729 = vmatpush2.xpose.msra.mxu0 0.0
        %730 = vmatprep.subr.mxu0 0.0
        %731 = vmatpush2.xpose.msra.mxu0 0.0
        %732 = vmatprep.subr.mxu0 0.0
        %733 = vmatpush2.xpose.msra.mxu0 0.0
        %734 = vmatprep.subr.mxu0 0.0
        %735 = vmatpush2.xpose.msra.mxu0 0.0
        %736 = vmatprep.subr.mxu0 0.0
        %737 = vmatpush2.xpose.msra.mxu0 0.0
        %738 = vmatprep.subr.mxu0 0.0
        %739 = vmatpush2.xpose.msra.mxu0 0.0
        %740 = vmatprep.subr.mxu0 0.0
        %741 = vmatpush2.xpose.msra.mxu0 0.0
        %742 = vmatprep.subr.mxu0 0.0
        %743 = vmatpush2.xpose.msra.mxu0 0.0
        %744 = vmatprep.subr.mxu0 0.0
        %745 = vmatpush2.xpose.msra.mxu0 0.0
        %746 = vmatprep.subr.mxu0 0.0
        %747 = vmatpush2.xpose.msra.mxu0 0.0
        %748 = vmatprep.subr.mxu0 0.0
        %749 = vmatpush2.xpose.msra.mxu0 0.0
        %750 = vmatprep.subr.mxu0 0.0
        %751 = vmatpush2.xpose.msra.mxu0 0.0
        %752 = vmatprep.subr.mxu0 0.0
        %753 = vmatpush2.xpose.msra.mxu0 0.0
        %754 = vmatprep.subr.mxu0 0.0
        %755 = vmatpush2.xpose.msra.mxu0 0.0
        %756 = vmatprep.mubr.f32.mxu0 0.0
        %757 = vmatmul.mubr.f32.gmra.mxu0 %v687
        %v758 = vpop.f32.mrf.mxu0
        %v759 = vadd.f32 0.0, %v758
        %v760 = vpop.f32.mrf.mxu0
        %761 = vdwg.mxu0
        %v762 = vsel %vm685, %v759, -inf
        %763 = vmax.xlane.f32.xlu0 %v762
        %v764 = vpop.xlane.xlu0 %763
        %v765 = vsub.f32 %v759, %v764
        %v766 = vmul.f32 %v765, 1.442695
        %v767 = vpow.pop %v766
        %v768 = vsel %vm685, %v767, 0.0
        %769 = vadd.xlane.f32.xlu0 %v768
        %v770 = vpop.xlane.xlu0 %769
        %v771 = vrcp.pop %v770
        %v772 = vmul.f32 %v767, %v771
        %v774 = vsel %vm685, %v772, 0
        %776 = vmatprep.subr.mxu0 0.0
        %777 = vmatpush1.msra.mxu0 0.0
        %778 = vmatprep.subr.mxu0 0.0
        %779 = vmatpush1.msra.mxu0 0.0
        %780 = vmatprep.subr.mxu0 0.0
        %781 = vmatpush1.msra.mxu0 0.0
        %782 = vmatprep.subr.mxu0 0.0
        %783 = vmatpush1.msra.mxu0 0.0
        %784 = vmatprep.subr.mxu0 0.0
        %785 = vmatpush1.msra.mxu0 0.0
        %786 = vmatprep.subr.mxu0 0.0
        %787 = vmatpush1.msra.mxu0 0.0
        %788 = vmatprep.subr.mxu0 0.0
        %789 = vmatpush1.msra.mxu0 0.0
        %790 = vmatprep.subr.mxu0 0.0
        %791 = vmatpush1.msra.mxu0 0.0
        %792 = vmatprep.subr.mxu0 0.0
        %793 = vmatpush1.msra.mxu0 0.0
        %794 = vmatprep.subr.mxu0 0.0
        %795 = vmatpush1.msra.mxu0 0.0
        %796 = vmatprep.subr.mxu0 0.0
        %797 = vmatpush1.msra.mxu0 0.0
        %798 = vmatprep.subr.mxu0 0.0
        %799 = vmatpush1.msra.mxu0 0.0
        %800 = vmatprep.subr.mxu0 0.0
        %801 = vmatpush1.msra.mxu0 0.0
        %802 = vmatprep.subr.mxu0 0.0
        %803 = vmatpush1.msra.mxu0 0.0
        %804 = vmatprep.subr.mxu0 0.0
        %805 = vmatpush1.msra.mxu0 0.0
        %806 = vmatprep.subr.mxu0 0.0
        %807 = vmatpush1.msra.mxu0 %v526
        %808 = vmatprep.subr.mxu0 0.0
        %809 = vmatpush2.msra.mxu0 0.0
        %810 = vmatprep.subr.mxu0 0.0
        %811 = vmatpush2.msra.mxu0 0.0
        %812 = vmatprep.subr.mxu0 0.0
        %813 = vmatpush2.msra.mxu0 0.0
        %814 = vmatprep.subr.mxu0 0.0
        %815 = vmatpush2.msra.mxu0 0.0
        %816 = vmatprep.subr.mxu0 0.0
        %817 = vmatpush2.msra.mxu0 0.0
        %818 = vmatprep.subr.mxu0 0.0
        %819 = vmatpush2.msra.mxu0 0.0
        %820 = vmatprep.subr.mxu0 0.0
        %821 = vmatpush2.msra.mxu0 0.0
        %822 = vmatprep.subr.mxu0 0.0
        %823 = vmatpush2.msra.mxu0 0.0
        %824 = vmatprep.subr.mxu0 0.0
        %825 = vmatpush2.msra.mxu0 0.0
        %826 = vmatprep.subr.mxu0 0.0
        %827 = vmatpush2.msra.mxu0 0.0
        %828 = vmatprep.subr.mxu0 0.0
        %829 = vmatpush2.msra.mxu0 0.0
        %830 = vmatprep.subr.mxu0 0.0
        %831 = vmatpush2.msra.mxu0 0.0
        %832 = vmatprep.subr.mxu0 0.0
        %833 = vmatpush2.msra.mxu0 0.0
        %834 = vmatprep.subr.mxu0 0.0
        %835 = vmatpush2.msra.mxu0 0.0
        %836 = vmatprep.subr.mxu0 0.0
        %837 = vmatpush2.msra.mxu0 0.0
        %838 = vmatprep.subr.mxu0 0.0
        %839 = vmatpush2.msra.mxu0 0.0
        %840 = vmatprep.mubr.f32.mxu0 0.0
        %841 = vmatmul.mubr.f32.gmra.mxu0 %v774
        %v842 = vpop.f32.mrf.mxu0
        %v843 = vadd.f32 0.0, %v842
        %v844 = vpop.f32.mrf.mxu0
        %845 = vdwg.mxu0
        %846 = vrot.lane.b32.xlu0 %v682, 120
        %v847 = vpop.permute.xlu0 %846
        %848 = vrot.lane.b32.xlu0 %v604, 120
        %v849 = vpop.permute.xlu0 %848
        %v850 = vsel %vm685, %v847, 0
        %v852 = vsel %vm685, %v849, 0
        %854 = vmatprep.subr.mxu0 0.0
        %855 = vmatpush1.xpose.msra.mxu0 0.0
        %856 = vmatprep.subr.mxu0 0.0
        %857 = vmatpush1.xpose.msra.mxu0 0.0
        %858 = vmatprep.subr.mxu0 0.0
        %859 = vmatpush1.xpose.msra.mxu0 0.0
        %860 = vmatprep.subr.mxu0 0.0
        %861 = vmatpush1.xpose.msra.mxu0 0.0
        %862 = vmatprep.subr.mxu0 0.0
        %863 = vmatpush1.xpose.msra.mxu0 0.0
        %864 = vmatprep.subr.mxu0 0.0
        %865 = vmatpush1.xpose.msra.mxu0 0.0
        %866 = vmatprep.subr.mxu0 0.0
        %867 = vmatpush1.xpose.msra.mxu0 0.0
        %868 = vmatprep.subr.mxu0 0.0
        %869 = vmatpush1.xpose.msra.mxu0 0.0
        %870 = vmatprep.subr.mxu0 0.0
        %871 = vmatpush1.xpose.msra.mxu0 0.0
        %872 = vmatprep.subr.mxu0 0.0
        %873 = vmatpush1.xpose.msra.mxu0 0.0
        %874 = vmatprep.subr.mxu0 0.0
        %875 = vmatpush1.xpose.msra.mxu0 0.0
        %876 = vmatprep.subr.mxu0 0.0
        %877 = vmatpush1.xpose.msra.mxu0 0.0
        %878 = vmatprep.subr.mxu0 0.0
        %879 = vmatpush1.xpose.msra.mxu0 0.0
        %880 = vmatprep.subr.mxu0 0.0
        %881 = vmatpush1.xpose.msra.mxu0 0.0
        %882 = vmatprep.subr.mxu0 0.0
        %883 = vmatpush1.xpose.msra.mxu0 0.0
        %884 = vmatprep.subr.mxu0 0.0
        %885 = vmatpush1.xpose.msra.mxu0 %v852
        %886 = vmatprep.subr.mxu0 0.0
        %887 = vmatpush2.xpose.msra.mxu0 0.0
        %888 = vmatprep.subr.mxu0 0.0
        %889 = vmatpush2.xpose.msra.mxu0 0.0
        %890 = vmatprep.subr.mxu0 0.0
        %891 = vmatpush2.xpose.msra.mxu0 0.0
        %892 = vmatprep.subr.mxu0 0.0
        %893 = vmatpush2.xpose.msra.mxu0 0.0
        %894 = vmatprep.subr.mxu0 0.0
        %895 = vmatpush2.xpose.msra.mxu0 0.0
        %896 = vmatprep.subr.mxu0 0.0
        %897 = vmatpush2.xpose.msra.mxu0 0.0
        %898 = vmatprep.subr.mxu0 0.0
        %899 = vmatpush2.xpose.msra.mxu0 0.0
        %900 = vmatprep.subr.mxu0 0.0
        %901 = vmatpush2.xpose.msra.mxu0 0.0
        %902 = vmatprep.subr.mxu0 0.0
        %903 = vmatpush2.xpose.msra.mxu0 0.0
        %904 = vmatprep.subr.mxu0 0.0
        %905 = vmatpush2.xpose.msra.mxu0 0.0
        %906 = vmatprep.subr.mxu0 0.0
        %907 = vmatpush2.xpose.msra.mxu0 0.0
        %908 = vmatprep.subr.mxu0 0.0
        %909 = vmatpush2.xpose.msra.mxu0 0.0
        %910 = vmatprep.subr.mxu0 0.0
        %911 = vmatpush2.xpose.msra.mxu0 0.0
        %912 = vmatprep.subr.mxu0 0.0
        %913 = vmatpush2.xpose.msra.mxu0 0.0
        %914 = vmatprep.subr.mxu0 0.0
        %915 = vmatpush2.xpose.msra.mxu0 0.0
        %916 = vmatprep.subr.mxu0 0.0
        %917 = vmatpush2.xpose.msra.mxu0 0.0
        %918 = vmatprep.mubr.f32.mxu0 0.0
        %919 = vmatmul.mubr.f32.gmra.mxu0 %v850
        %v920 = vpop.f32.mrf.mxu0
        %v921 = vadd.f32 0.0, %v920
        %v922 = vpop.f32.mrf.mxu0
        %923 = vdwg.mxu0
        %v924 = vsel %vm685, %v921, -inf
        %925 = vmax.xlane.f32.xlu0 %v924
        %v926 = vpop.xlane.xlu0 %925
        %v927 = vsub.f32 %v921, %v926
        %v928 = vmul.f32 %v927, 1.442695
        %v929 = vpow.pop %v928
        %v930 = vsel %vm685, %v929, 0.0
        %931 = vadd.xlane.f32.xlu0 %v930
        %v932 = vpop.xlane.xlu0 %931
        %v933 = vrcp.pop %v932
        %v934 = vmul.f32 %v929, %v933
        %936 = vrot.lane.b32.xlu0 %v526, 120
        %v937 = vpop.permute.xlu0 %936
        %v940 = vsel %vm685, %v934, 0
        %942 = vmatprep.subr.mxu0 0.0
        %943 = vmatpush1.msra.mxu0 0.0
        %944 = vmatprep.subr.mxu0 0.0
        %945 = vmatpush1.msra.mxu0 0.0
        %946 = vmatprep.subr.mxu0 0.0
        %947 = vmatpush1.msra.mxu0 0.0
        %948 = vmatprep.subr.mxu0 0.0
        %949 = vmatpush1.msra.mxu0 0.0
        %950 = vmatprep.subr.mxu0 0.0
        %951 = vmatpush1.msra.mxu0 0.0
        %952 = vmatprep.subr.mxu0 0.0
        %953 = vmatpush1.msra.mxu0 0.0
        %954 = vmatprep.subr.mxu0 0.0
        %955 = vmatpush1.msra.mxu0 0.0
        %956 = vmatprep.subr.mxu0 0.0
        %957 = vmatpush1.msra.mxu0 0.0
        %958 = vmatprep.subr.mxu0 0.0
        %959 = vmatpush1.msra.mxu0 0.0
        %960 = vmatprep.subr.mxu0 0.0
        %961 = vmatpush1.msra.mxu0 0.0
        %962 = vmatprep.subr.mxu0 0.0
        %963 = vmatpush1.msra.mxu0 0.0
        %964 = vmatprep.subr.mxu0 0.0
        %965 = vmatpush1.msra.mxu0 0.0
        %966 = vmatprep.subr.mxu0 0.0
        %967 = vmatpush1.msra.mxu0 0.0
        %968 = vmatprep.subr.mxu0 0.0
        %969 = vmatpush1.msra.mxu0 0.0
        %970 = vmatprep.subr.mxu0 0.0
        %971 = vmatpush1.msra.mxu0 0.0
        %972 = vmatprep.subr.mxu0 0.0
        %973 = vmatpush1.msra.mxu0 %v937
        %974 = vmatprep.subr.mxu0 0.0
        %975 = vmatpush2.msra.mxu0 0.0
        %976 = vmatprep.subr.mxu0 0.0
        %977 = vmatpush2.msra.mxu0 0.0
        %978 = vmatprep.subr.mxu0 0.0
        %979 = vmatpush2.msra.mxu0 0.0
        %980 = vmatprep.subr.mxu0 0.0
        %981 = vmatpush2.msra.mxu0 0.0
        %982 = vmatprep.subr.mxu0 0.0
        %983 = vmatpush2.msra.mxu0 0.0
        %984 = vmatprep.subr.mxu0 0.0
        %985 = vmatpush2.msra.mxu0 0.0
        %986 = vmatprep.subr.mxu0 0.0
        %987 = vmatpush2.msra.mxu0 0.0
        %988 = vmatprep.subr.mxu0 0.0
        %989 = vmatpush2.msra.mxu0 0.0
        %990 = vmatprep.subr.mxu0 0.0
        %991 = vmatpush2.msra.mxu0 0.0
        %992 = vmatprep.subr.mxu0 0.0
        %993 = vmatpush2.msra.mxu0 0.0
        %994 = vmatprep.subr.mxu0 0.0
        %995 = vmatpush2.msra.mxu0 0.0
        %996 = vmatprep.subr.mxu0 0.0
        %997 = vmatpush2.msra.mxu0 0.0
        %998 = vmatprep.subr.mxu0 0.0
        %999 = vmatpush2.msra.mxu0 0.0
        %1000 = vmatprep.subr.mxu0 0.0
        %1001 = vmatpush2.msra.mxu0 0.0
        %1002 = vmatprep.subr.mxu0 0.0
        %1003 = vmatpush2.msra.mxu0 0.0
        %1004 = vmatprep.subr.mxu0 0.0
        %1005 = vmatpush2.msra.mxu0 0.0
        %1006 = vmatprep.mubr.f32.mxu0 0.0
        %1007 = vmatmul.mubr.f32.gmra.mxu0 %v940
        %v1008 = vpop.f32.mrf.mxu0
        %v1009 = vadd.f32 0.0, %v1008
        %v1010 = vpop.f32.mrf.mxu0
        %1011 = vdwg.mxu0
        %1012 = vrot.lane.b32.xlu0 %v682, 112
        %v1013 = vpop.permute.xlu0 %1012
        %1014 = vrot.lane.b32.xlu0 %v604, 112
        %v1015 = vpop.permute.xlu0 %1014
        %v1016 = vsel %vm685, %v1013, 0
        %v1018 = vsel %vm685, %v1015, 0
        %1020 = vmatprep.subr.mxu0 0.0
        %1021 = vmatpush1.xpose.msra.mxu0 0.0
        %1022 = vmatprep.subr.mxu0 0.0
        %1023 = vmatpush1.xpose.msra.mxu0 0.0
        %1024 = vmatprep.subr.mxu0 0.0
        %1025 = vmatpush1.xpose.msra.mxu0 0.0
        %1026 = vmatprep.subr.mxu0 0.0
        %1027 = vmatpush1.xpose.msra.mxu0 0.0
        %1028 = vmatprep.subr.mxu0 0.0
        %1029 = vmatpush1.xpose.msra.mxu0 0.0
        %1030 = vmatprep.subr.mxu0 0.0
        %1031 = vmatpush1.xpose.msra.mxu0 0.0
        %1032 = vmatprep.subr.mxu0 0.0
        %1033 = vmatpush1.xpose.msra.mxu0 0.0
        %1034 = vmatprep.subr.mxu0 0.0
        %1035 = vmatpush1.xpose.msra.mxu0 0.0
        %1036 = vmatprep.subr.mxu0 0.0
        %1037 = vmatpush1.xpose.msra.mxu0 0.0
        %1038 = vmatprep.subr.mxu0 0.0
        %1039 = vmatpush1.xpose.msra.mxu0 0.0
        %1040 = vmatprep.subr.mxu0 0.0
        %1041 = vmatpush1.xpose.msra.mxu0 0.0
        %1042 = vmatprep.subr.mxu0 0.0
        %1043 = vmatpush1.xpose.msra.mxu0 0.0
        %1044 = vmatprep.subr.mxu0 0.0
        %1045 = vmatpush1.xpose.msra.mxu0 0.0
        %1046 = vmatprep.subr.mxu0 0.0
        %1047 = vmatpush1.xpose.msra.mxu0 0.0
        %1048 = vmatprep.subr.mxu0 0.0
        %1049 = vmatpush1.xpose.msra.mxu0 0.0
        %1050 = vmatprep.subr.mxu0 0.0
        %1051 = vmatpush1.xpose.msra.mxu0 %v1018
        %1052 = vmatprep.subr.mxu0 0.0
        %1053 = vmatpush2.xpose.msra.mxu0 0.0
        %1054 = vmatprep.subr.mxu0 0.0
        %1055 = vmatpush2.xpose.msra.mxu0 0.0
        %1056 = vmatprep.subr.mxu0 0.0
        %1057 = vmatpush2.xpose.msra.mxu0 0.0
        %1058 = vmatprep.subr.mxu0 0.0
        %1059 = vmatpush2.xpose.msra.mxu0 0.0
        %1060 = vmatprep.subr.mxu0 0.0
        %1061 = vmatpush2.xpose.msra.mxu0 0.0
        %1062 = vmatprep.subr.mxu0 0.0
        %1063 = vmatpush2.xpose.msra.mxu0 0.0
        %1064 = vmatprep.subr.mxu0 0.0
        %1065 = vmatpush2.xpose.msra.mxu0 0.0
        %1066 = vmatprep.subr.mxu0 0.0
        %1067 = vmatpush2.xpose.msra.mxu0 0.0
        %1068 = vmatprep.subr.mxu0 0.0
        %1069 = vmatpush2.xpose.msra.mxu0 0.0
        %1070 = vmatprep.subr.mxu0 0.0
        %1071 = vmatpush2.xpose.msra.mxu0 0.0
        %1072 = vmatprep.subr.mxu0 0.0
        %1073 = vmatpush2.xpose.msra.mxu0 0.0
        %1074 = vmatprep.subr.mxu0 0.0
        %1075 = vmatpush2.xpose.msra.mxu0 0.0
        %1076 = vmatprep.subr.mxu0 0.0
        %1077 = vmatpush2.xpose.msra.mxu0 0.0
        %1078 = vmatprep.subr.mxu0 0.0
        %1079 = vmatpush2.xpose.msra.mxu0 0.0
        %1080 = vmatprep.subr.mxu0 0.0
        %1081 = vmatpush2.xpose.msra.mxu0 0.0
        %1082 = vmatprep.subr.mxu0 0.0
        %1083 = vmatpush2.xpose.msra.mxu0 0.0
        %1084 = vmatprep.mubr.f32.mxu0 0.0
        %1085 = vmatmul.mubr.f32.gmra.mxu0 %v1016
        %v1086 = vpop.f32.mrf.mxu0
        %v1087 = vadd.f32 0.0, %v1086
        %v1088 = vpop.f32.mrf.mxu0
        %1089 = vdwg.mxu0
        %v1090 = vsel %vm685, %v1087, -inf
        %1091 = vmax.xlane.f32.xlu0 %v1090
        %v1092 = vpop.xlane.xlu0 %1091
        %v1093 = vsub.f32 %v1087, %v1092
        %v1094 = vmul.f32 %v1093, 1.442695
        %v1095 = vpow.pop %v1094
        %v1096 = vsel %vm685, %v1095, 0.0
        %1097 = vadd.xlane.f32.xlu0 %v1096
        %v1098 = vpop.xlane.xlu0 %1097
        %v1099 = vrcp.pop %v1098
        %v1100 = vmul.f32 %v1095, %v1099
        %1101 = vrot.lane.b32.xlu0 %v526, 112
        %v1102 = vpop.permute.xlu0 %1101
        %v1105 = vsel %vm685, %v1100, 0
        %1107 = vmatprep.subr.mxu0 0.0
        %1108 = vmatpush1.msra.mxu0 0.0
        %1109 = vmatprep.subr.mxu0 0.0
        %1110 = vmatpush1.msra.mxu0 0.0
        %1111 = vmatprep.subr.mxu0 0.0
        %1112 = vmatpush1.msra.mxu0 0.0
        %1113 = vmatprep.subr.mxu0 0.0
        %1114 = vmatpush1.msra.mxu0 0.0
        %1115 = vmatprep.subr.mxu0 0.0
        %1116 = vmatpush1.msra.mxu0 0.0
        %1117 = vmatprep.subr.mxu0 0.0
        %1118 = vmatpush1.msra.mxu0 0.0
        %1119 = vmatprep.subr.mxu0 0.0
        %1120 = vmatpush1.msra.mxu0 0.0
        %1121 = vmatprep.subr.mxu0 0.0
        %1122 = vmatpush1.msra.mxu0 0.0
        %1123 = vmatprep.subr.mxu0 0.0
        %1124 = vmatpush1.msra.mxu0 0.0
        %1125 = vmatprep.subr.mxu0 0.0
        %1126 = vmatpush1.msra.mxu0 0.0
        %1127 = vmatprep.subr.mxu0 0.0
        %1128 = vmatpush1.msra.mxu0 0.0
        %1129 = vmatprep.subr.mxu0 0.0
        %1130 = vmatpush1.msra.mxu0 0.0
        %1131 = vmatprep.subr.mxu0 0.0
        %1132 = vmatpush1.msra.mxu0 0.0
        %1133 = vmatprep.subr.mxu0 0.0
        %1134 = vmatpush1.msra.mxu0 0.0
        %1135 = vmatprep.subr.mxu0 0.0
        %1136 = vmatpush1.msra.mxu0 0.0
        %1137 = vmatprep.subr.mxu0 0.0
        %1138 = vmatpush1.msra.mxu0 %v1102
        %1139 = vmatprep.subr.mxu0 0.0
        %1140 = vmatpush2.msra.mxu0 0.0
        %1141 = vmatprep.subr.mxu0 0.0
        %1142 = vmatpush2.msra.mxu0 0.0
        %1143 = vmatprep.subr.mxu0 0.0
        %1144 = vmatpush2.msra.mxu0 0.0
        %1145 = vmatprep.subr.mxu0 0.0
        %1146 = vmatpush2.msra.mxu0 0.0
        %1147 = vmatprep.subr.mxu0 0.0
        %1148 = vmatpush2.msra.mxu0 0.0
        %1149 = vmatprep.subr.mxu0 0.0
        %1150 = vmatpush2.msra.mxu0 0.0
        %1151 = vmatprep.subr.mxu0 0.0
        %1152 = vmatpush2.msra.mxu0 0.0
        %1153 = vmatprep.subr.mxu0 0.0
        %1154 = vmatpush2.msra.mxu0 0.0
        %1155 = vmatprep.subr.mxu0 0.0
        %1156 = vmatpush2.msra.mxu0 0.0
        %1157 = vmatprep.subr.mxu0 0.0
        %1158 = vmatpush2.msra.mxu0 0.0
        %1159 = vmatprep.subr.mxu0 0.0
        %1160 = vmatpush2.msra.mxu0 0.0
        %1161 = vmatprep.subr.mxu0 0.0
        %1162 = vmatpush2.msra.mxu0 0.0
        %1163 = vmatprep.subr.mxu0 0.0
        %1164 = vmatpush2.msra.mxu0 0.0
        %1165 = vmatprep.subr.mxu0 0.0
        %1166 = vmatpush2.msra.mxu0 0.0
        %1167 = vmatprep.subr.mxu0 0.0
        %1168 = vmatpush2.msra.mxu0 0.0
        %1169 = vmatprep.subr.mxu0 0.0
        %1170 = vmatpush2.msra.mxu0 0.0
        %1171 = vmatprep.mubr.f32.mxu0 0.0
        %1172 = vmatmul.mubr.f32.gmra.mxu0 %v1105
        %v1173 = vpop.f32.mrf.mxu0
        %v1174 = vadd.f32 0.0, %v1173
        %v1175 = vpop.f32.mrf.mxu0
        %1176 = vdwg.mxu0
        %1177 = vrot.lane.b32.xlu0 %v682, 104
        %v1178 = vpop.permute.xlu0 %1177
        %1179 = vrot.lane.b32.xlu0 %v604, 104
        %v1180 = vpop.permute.xlu0 %1179
        %v1181 = vsel %vm685, %v1178, 0
        %v1183 = vsel %vm685, %v1180, 0
        %1185 = vmatprep.subr.mxu0 0.0
        %1186 = vmatpush1.xpose.msra.mxu0 0.0
        %1187 = vmatprep.subr.mxu0 0.0
        %1188 = vmatpush1.xpose.msra.mxu0 0.0
        %1189 = vmatprep.subr.mxu0 0.0
        %1190 = vmatpush1.xpose.msra.mxu0 0.0
        %1191 = vmatprep.subr.mxu0 0.0
        %1192 = vmatpush1.xpose.msra.mxu0 0.0
        %1193 = vmatprep.subr.mxu0 0.0
        %1194 = vmatpush1.xpose.msra.mxu0 0.0
        %1195 = vmatprep.subr.mxu0 0.0
        %1196 = vmatpush1.xpose.msra.mxu0 0.0
        %1197 = vmatprep.subr.mxu0 0.0
        %1198 = vmatpush1.xpose.msra.mxu0 0.0
        %1199 = vmatprep.subr.mxu0 0.0
        %1200 = vmatpush1.xpose.msra.mxu0 0.0
        %1201 = vmatprep.subr.mxu0 0.0
        %1202 = vmatpush1.xpose.msra.mxu0 0.0
        %1203 = vmatprep.subr.mxu0 0.0
        %1204 = vmatpush1.xpose.msra.mxu0 0.0
        %1205 = vmatprep.subr.mxu0 0.0
        %1206 = vmatpush1.xpose.msra.mxu0 0.0
        %1207 = vmatprep.subr.mxu0 0.0
        %1208 = vmatpush1.xpose.msra.mxu0 0.0
        %1209 = vmatprep.subr.mxu0 0.0
        %1210 = vmatpush1.xpose.msra.mxu0 0.0
        %1211 = vmatprep.subr.mxu0 0.0
        %1212 = vmatpush1.xpose.msra.mxu0 0.0
        %1213 = vmatprep.subr.mxu0 0.0
        %1214 = vmatpush1.xpose.msra.mxu0 0.0
        %1215 = vmatprep.subr.mxu0 0.0
        %1216 = vmatpush1.xpose.msra.mxu0 %v1183
        %1217 = vmatprep.subr.mxu0 0.0
        %1218 = vmatpush2.xpose.msra.mxu0 0.0
        %1219 = vmatprep.subr.mxu0 0.0
        %1220 = vmatpush2.xpose.msra.mxu0 0.0
        %1221 = vmatprep.subr.mxu0 0.0
        %1222 = vmatpush2.xpose.msra.mxu0 0.0
        %1223 = vmatprep.subr.mxu0 0.0
        %1224 = vmatpush2.xpose.msra.mxu0 0.0
        %1225 = vmatprep.subr.mxu0 0.0
        %1226 = vmatpush2.xpose.msra.mxu0 0.0
        %1227 = vmatprep.subr.mxu0 0.0
        %1228 = vmatpush2.xpose.msra.mxu0 0.0
        %1229 = vmatprep.subr.mxu0 0.0
        %1230 = vmatpush2.xpose.msra.mxu0 0.0
        %1231 = vmatprep.subr.mxu0 0.0
        %1232 = vmatpush2.xpose.msra.mxu0 0.0
        %1233 = vmatprep.subr.mxu0 0.0
        %1234 = vmatpush2.xpose.msra.mxu0 0.0
        %1235 = vmatprep.subr.mxu0 0.0
        %1236 = vmatpush2.xpose.msra.mxu0 0.0
        %1237 = vmatprep.subr.mxu0 0.0
        %1238 = vmatpush2.xpose.msra.mxu0 0.0
        %1239 = vmatprep.subr.mxu0 0.0
        %1240 = vmatpush2.xpose.msra.mxu0 0.0
        %1241 = vmatprep.subr.mxu0 0.0
        %1242 = vmatpush2.xpose.msra.mxu0 0.0
        %1243 = vmatprep.subr.mxu0 0.0
        %1244 = vmatpush2.xpose.msra.mxu0 0.0
        %1245 = vmatprep.subr.mxu0 0.0
        %1246 = vmatpush2.xpose.msra.mxu0 0.0
        %1247 = vmatprep.subr.mxu0 0.0
        %1248 = vmatpush2.xpose.msra.mxu0 0.0
        %1249 = vmatprep.mubr.f32.mxu0 0.0
        %1250 = vmatmul.mubr.f32.gmra.mxu0 %v1181
        %v1251 = vpop.f32.mrf.mxu0
        %v1252 = vadd.f32 0.0, %v1251
        %v1253 = vpop.f32.mrf.mxu0
        %1254 = vdwg.mxu0
        %v1255 = vsel %vm685, %v1252, -inf
        %1256 = vmax.xlane.f32.xlu0 %v1255
        %v1257 = vpop.xlane.xlu0 %1256
        %v1258 = vsub.f32 %v1252, %v1257
        %v1259 = vmul.f32 %v1258, 1.442695
        %v1260 = vpow.pop %v1259
        %v1261 = vsel %vm685, %v1260, 0.0
        %1262 = vadd.xlane.f32.xlu0 %v1261
        %v1263 = vpop.xlane.xlu0 %1262
        %v1264 = vrcp.pop %v1263
        %v1265 = vmul.f32 %v1260, %v1264
        %1266 = vrot.lane.b32.xlu0 %v526, 104
        %v1267 = vpop.permute.xlu0 %1266
        %v1270 = vsel %vm685, %v1265, 0
        %1272 = vmatprep.subr.mxu0 0.0
        %1273 = vmatpush1.msra.mxu0 0.0
        %1274 = vmatprep.subr.mxu0 0.0
        %1275 = vmatpush1.msra.mxu0 0.0
        %1276 = vmatprep.subr.mxu0 0.0
        %1277 = vmatpush1.msra.mxu0 0.0
        %1278 = vmatprep.subr.mxu0 0.0
        %1279 = vmatpush1.msra.mxu0 0.0
        %1280 = vmatprep.subr.mxu0 0.0
        %1281 = vmatpush1.msra.mxu0 0.0
        %1282 = vmatprep.subr.mxu0 0.0
        %1283 = vmatpush1.msra.mxu0 0.0
        %1284 = vmatprep.subr.mxu0 0.0
        %1285 = vmatpush1.msra.mxu0 0.0
        %1286 = vmatprep.subr.mxu0 0.0
        %1287 = vmatpush1.msra.mxu0 0.0
        %1288 = vmatprep.subr.mxu0 0.0
        %1289 = vmatpush1.msra.mxu0 0.0
        %1290 = vmatprep.subr.mxu0 0.0
        %1291 = vmatpush1.msra.mxu0 0.0
        %1292 = vmatprep.subr.mxu0 0.0
        %1293 = vmatpush1.msra.mxu0 0.0
        %1294 = vmatprep.subr.mxu0 0.0
        %1295 = vmatpush1.msra.mxu0 0.0
        %1296 = vmatprep.subr.mxu0 0.0
        %1297 = vmatpush1.msra.mxu0 0.0
        %1298 = vmatprep.subr.mxu0 0.0
        %1299 = vmatpush1.msra.mxu0 0.0
        %1300 = vmatprep.subr.mxu0 0.0
        %1301 = vmatpush1.msra.mxu0 0.0
        %1302 = vmatprep.subr.mxu0 0.0
        %1303 = vmatpush1.msra.mxu0 %v1267
        %1304 = vmatprep.subr.mxu0 0.0
        %1305 = vmatpush2.msra.mxu0 0.0
        %1306 = vmatprep.subr.mxu0 0.0
        %1307 = vmatpush2.msra.mxu0 0.0
        %1308 = vmatprep.subr.mxu0 0.0
        %1309 = vmatpush2.msra.mxu0 0.0
        %1310 = vmatprep.subr.mxu0 0.0
        %1311 = vmatpush2.msra.mxu0 0.0
        %1312 = vmatprep.subr.mxu0 0.0
        %1313 = vmatpush2.msra.mxu0 0.0
        %1314 = vmatprep.subr.mxu0 0.0
        %1315 = vmatpush2.msra.mxu0 0.0
        %1316 = vmatprep.subr.mxu0 0.0
        %1317 = vmatpush2.msra.mxu0 0.0
        %1318 = vmatprep.subr.mxu0 0.0
        %1319 = vmatpush2.msra.mxu0 0.0
        %1320 = vmatprep.subr.mxu0 0.0
        %1321 = vmatpush2.msra.mxu0 0.0
        %1322 = vmatprep.subr.mxu0 0.0
        %1323 = vmatpush2.msra.mxu0 0.0
        %1324 = vmatprep.subr.mxu0 0.0
        %1325 = vmatpush2.msra.mxu0 0.0
        %1326 = vmatprep.subr.mxu0 0.0
        %1327 = vmatpush2.msra.mxu0 0.0
        %1328 = vmatprep.subr.mxu0 0.0
        %1329 = vmatpush2.msra.mxu0 0.0
        %1330 = vmatprep.subr.mxu0 0.0
        %1331 = vmatpush2.msra.mxu0 0.0
        %1332 = vmatprep.subr.mxu0 0.0
        %1333 = vmatpush2.msra.mxu0 0.0
        %1334 = vmatprep.subr.mxu0 0.0
        %1335 = vmatpush2.msra.mxu0 0.0
        %1336 = vmatprep.mubr.f32.mxu0 0.0
        %1337 = vmatmul.mubr.f32.gmra.mxu0 %v1270
        %v1338 = vpop.f32.mrf.mxu0
        %v1339 = vadd.f32 0.0, %v1338
        %v1340 = vpop.f32.mrf.mxu0
        %1341 = vdwg.mxu0
        %1343 = vrot.lane.b32.xlu0 %v1009, 8
        %v1344 = vpop.permute.xlu0 %1343
        %1347 = vrot.lane.b32.xlu0 %v1174, 16
        %v1348 = vpop.permute.xlu0 %1347
        %1351 = vrot.lane.b32.xlu0 %v1339, 24
        %v1352 = vpop.permute.xlu0 %1351
        %v1354 = vsel %vm685, %v843, %v1344
        %vm1355 = vcmask 130048
        %v1356 = vsel %vm1355, %v1354, %v1348
        %vm1357 = vcmask 195584
        %v1358 = vsel %vm1357, %v1356, %v1352
        %v1359 = vld [vmem:[#allocation13] sm:$0xff]
        %v1360 = vld [vmem:[#allocation13 + $0x8] sm:$0xff]
        %v1361 = vld [vmem:[#allocation13 + $0x10] sm:$0xff]
        %v1362 = vld [vmem:[#allocation13 + $0x18] sm:$0xff]
        %v1363 = vld [vmem:[%s7] sm:$0x1]
        %v1365 = vlaneseq
        %v1366 = vshrl.u32 %v1365, 7
        %v1367 = vsub.s32 0, %v1366
        %v1368 = vrot.slane %v1363, %v1367
        %v1371 = vsel %vm455, %v1358, 0
        %1373 = vmatprep.subr.mxu0 0.0
        %1374 = vmatpush1.msra.mxu0 0.0
        %1375 = vmatprep.subr.mxu0 0.0
        %1376 = vmatpush1.msra.mxu0 0.0
        %1377 = vmatprep.subr.mxu0 0.0
        %1378 = vmatpush1.msra.mxu0 0.0
        %1379 = vmatprep.subr.mxu0 0.0
        %1380 = vmatpush1.msra.mxu0 0.0
        %1381 = vmatprep.subr.mxu0 0.0
        %1382 = vmatpush1.msra.mxu0 0.0
        %1383 = vmatprep.subr.mxu0 0.0
        %1384 = vmatpush1.msra.mxu0 0.0
        %1385 = vmatprep.subr.mxu0 0.0
        %1386 = vmatpush1.msra.mxu0 0.0
        %1387 = vmatprep.subr.mxu0 0.0
        %1388 = vmatpush1.msra.mxu0 0.0
        %1389 = vmatprep.subr.mxu0 0.0
        %1390 = vmatpush1.msra.mxu0 0.0
        %1391 = vmatprep.subr.mxu0 0.0
        %1392 = vmatpush1.msra.mxu0 0.0
        %1393 = vmatprep.subr.mxu0 0.0
        %1394 = vmatpush1.msra.mxu0 0.0
        %1395 = vmatprep.subr.mxu0 0.0
        %1396 = vmatpush1.msra.mxu0 0.0
        %1397 = vmatprep.subr.mxu0 0.0
        %1398 = vmatpush1.msra.mxu0 %v1362
        %1399 = vmatprep.subr.mxu0 0.0
        %1400 = vmatpush1.msra.mxu0 %v1361
        %1401 = vmatprep.subr.mxu0 0.0
        %1402 = vmatpush1.msra.mxu0 %v1360
        %1403 = vmatprep.subr.mxu0 0.0
        %1404 = vmatpush1.msra.mxu0 %v1359
        %1405 = vmatprep.subr.mxu0 0.0
        %1406 = vmatpush2.msra.mxu0 0.0
        %1407 = vmatprep.subr.mxu0 0.0
        %1408 = vmatpush2.msra.mxu0 0.0
        %1409 = vmatprep.subr.mxu0 0.0
        %1410 = vmatpush2.msra.mxu0 0.0
        %1411 = vmatprep.subr.mxu0 0.0
        %1412 = vmatpush2.msra.mxu0 0.0
        %1413 = vmatprep.subr.mxu0 0.0
        %1414 = vmatpush2.msra.mxu0 0.0
        %1415 = vmatprep.subr.mxu0 0.0
        %1416 = vmatpush2.msra.mxu0 0.0
        %1417 = vmatprep.subr.mxu0 0.0
        %1418 = vmatpush2.msra.mxu0 0.0
        %1419 = vmatprep.subr.mxu0 0.0
        %1420 = vmatpush2.msra.mxu0 0.0
        %1421 = vmatprep.subr.mxu0 0.0
        %1422 = vmatpush2.msra.mxu0 0.0
        %1423 = vmatprep.subr.mxu0 0.0
        %1424 = vmatpush2.msra.mxu0 0.0
        %1425 = vmatprep.subr.mxu0 0.0
        %1426 = vmatpush2.msra.mxu0 0.0
        %1427 = vmatprep.subr.mxu0 0.0
        %1428 = vmatpush2.msra.mxu0 0.0
        %1429 = vmatprep.subr.mxu0 0.0
        %1430 = vmatpush2.msra.mxu0 0.0
        %1431 = vmatprep.subr.mxu0 0.0
        %1432 = vmatpush2.msra.mxu0 0.0
        %1433 = vmatprep.subr.mxu0 0.0
        %1434 = vmatpush2.msra.mxu0 0.0
        %1435 = vmatprep.subr.mxu0 0.0
        %1436 = vmatpush2.msra.mxu0 0.0
        %1437 = vmatprep.mubr.f32.mxu0 0.0
        %1438 = vmatmul.mubr.f32.gmra.mxu0 %v1371
        %v1439 = vpop.f32.mrf.mxu0
        %v1440 = vadd.f32 %v1368, %v1439
        %v1441 = vpop.f32.mrf.mxu0
        %1442 = vdwg.mxu0
        %1443 = vst [vmem:[%s449] sm:$0xff] %v1440
        %s1444 = sand.u32 %s221, 1
        %s1445 = scalar_lea.sflag [#allocation4], %s1444
        %s1446 = sand.u32 %s221, 1
        %s1447 = smul.addr %s1446, 8
        %s1448 = scalar_lea.vmem [#allocation14], %s1447
        // Predicated region
        $region81: #{tpu_custom_call.1} parent=51 // pred_check
          %p1449 = pneg %p231
        $region82: #{tpu_custom_call.1} parent=51 // pred_check_branch
          %1451 = sbr.rel (%p1449) target = $region84
        $region83: #{tpu_custom_call.1} parent=51 // pred_region
          %s1453 = ssub.s32 128, 128
          %1454 = vsyncadd %s1445, %s1453
          %s1455 = smul.addr %s30, 128
          %s1456 = scalar_lea.hbm %s8, %s1455
          %s1458 = sshll.u32 %s1448, 4
          %s1459 = int_to_ptr.vmem [resolvable:$true] %s1458
          %1461 = dma.vmem_to_hbm [thread:$0]  %s1459, 128, %s1456, %s1445
        $region84: #{tpu_custom_call.1} parent=51 // pred_fallthru
          _
      $region52: #{tpu_custom_call.1} parent=5 // pred_fallthru
        _
      %p1462 = scmp.le.s32.totalorder 2, %s25
      // Predicated region
      $region85: #{tpu_custom_call.1} parent=5 // pred_check
        %p1463 = pneg %p1462
      $region86: #{tpu_custom_call.1} parent=5 // pred_check_branch
        %1465 = sbr.rel (%p1463) target = $region88
      $region87: #{tpu_custom_call.1} parent=5 // pred_region
        %s1466 = ssub.s32 %s25, 2
        // Predicated region
        $region89: #{tpu_custom_call.1} parent=87 // pred_check
          %p1467 = pneg %p237
        $region90: #{tpu_custom_call.1} parent=87 // pred_check_branch
          %1469 = sbr.rel (%p1467) target = $region92
        $region91: #{tpu_custom_call.1} parent=87 // pred_region
          %s1470 = sand.u32 %s222, 1
          %s1471 = scalar_lea.sflag [#allocation4], %s1470
          %s1472 = sand.u32 %s222, 1
          %s1473 = smul.addr %s1472, 8
          %s1474 = scalar_lea.vmem [#allocation14], %s1473
          %1475 = dma.done %s1471, 128
        $region92: #{tpu_custom_call.1} parent=87 // pred_fallthru
          _
      $region88: #{tpu_custom_call.1} parent=5 // pred_fallthru
        _
    $region6: #{tpu_custom_call.1} parent=1 // loop_footer
      %s29 = sadd.s32 1, %s25
    $region7: #{tpu_custom_call.1} parent=1 // loop_footer_branch
      %24 = sbr.rel target = $region3
    $region8: #{tpu_custom_call.1} parent=1 // loop_exit
      _
    %1476 = vsyncpa [#allocation3], 1
    %s1477 = scalar_lea.sflag [#allocation3], 1
    %1478 = vsyncpa %s1477, 1
    %1479 = vsyncpa [#allocation6], 1
    %s1480 = scalar_lea.sflag [#allocation6], 1
    %1481 = vsyncpa %s1480, 1
    %1482 = vsyncpa [#allocation9], 1
    %1483 = vsyncpa [#allocation12], 1
    %1484 = vsyncpa [#allocation4], 1
    %s1485 = scalar_lea.sflag [#allocation4], 1
    %1486 = vsyncpa %s1485, 1

</llo_original>
